<compile_context>
chip_gen: v6e
topology: v6e:2x2x1
jax: 0.10.0
libtpu: 0.0.40
codegen_flags: <defaults>
</compile_context>

<pallas_src>
import jax
import jax.numpy as jnp
from jax.experimental import pallas as pl
from jax.experimental.pallas import tpu as pltpu


def discriminator_kernel(x_ref, w1_ref, b1_ref, w2_ref, b2_ref, w3_ref,
                         b3_ref, o_ref):
    # x_ref: [tb, nin] f32     w1: [nh1, nin] bf16   b1: [nh1, 1] f32
    # w2:    [nh2, nh1] bf16   b2: [nh2, 1] f32      w3: [nh2, 1] f32
    # b3:    SMEM (1,) f32     o_ref: [1, 1, tb] f32
    x_bf = x_ref[...].astype(jnp.bfloat16)                       # in-kernel cast

    # Layer 1: W1 @ x.T  (contract both operands' last dim; Mosaic handles the
    # transposed RHS, so no wrapper-side transpose pass over x in HBM).
    h1 = jax.lax.dot_general(
        w1_ref[...], x_bf,
        dimension_numbers=(((1,), (1,)), ((), ())),
        preferred_element_type=jnp.float32)                      # [nh1, tb] f32
    h1_bf = jnp.maximum(h1 + b1_ref[...], 0.0).astype(jnp.bfloat16)

    # Layer 2.
    h2 = jnp.dot(w2_ref[...], h1_bf,
                 preferred_element_type=jnp.float32)             # [nh2, tb] f32
    h2 = jnp.maximum(h2 + b2_ref[...], 0.0)

    # Layer 3 (nh2 -> 1): VPU multiply + XLU sublane reduce; result is already
    # lane-dense [1, tb], so the output store is an unmasked vst.
    logit = jnp.sum(h2 * w3_ref[...], axis=0, keepdims=True) + b3_ref[0]
    o_ref[0] = jax.nn.sigmoid(logit).astype(o_ref.dtype)


def _tile_bytes(rows, cols, itemsize):
    """VMEM footprint of a (rows, cols) block after (sublane, lane) padding."""
    sub = 8 * (4 // itemsize)           # 8 for f32, 16 for bf16
    r = -(-rows // sub) * sub
    c = -(-cols // 128) * 128
    return r * c * itemsize


def _vmem_limit_bytes(nin, nh1, nh2, bt, single_buffer):
    """Generation-aware scoped-VMEM limit (None => keep compiler default)."""
    w_bufs = 1 if single_buffer else 2
    resident = w_bufs * (
        _tile_bytes(nh1, nin, 2)                 # W1 (bf16)
        + _tile_bytes(nh1, 1, 4)                 # b1 column
        + _tile_bytes(nh2, nh1, 2)               # W2 (bf16)
        + 2 * _tile_bytes(nh2, 1, 4))            # b2, w3 columns
    streamed = 2 * (_tile_bytes(bt, nin, 4)      # x tile (f32), double-buffered
                    + _tile_bytes(1, bt, 4))     # output row
    temps = (_tile_bytes(bt, nin, 2)             # in-kernel bf16 x copy
             + _tile_bytes(nh1, bt, 4)           # layer-1 MXU accumulator
             + _tile_bytes(nh1, bt, 2)           # bf16 h1
             + 2 * _tile_bytes(nh2, bt, 4))      # h2, logit
    need = (resident + streamed + temps) * 3 // 2   # 1.5x headroom
    default_scoped = 32 * 1024 * 1024
    if need <= default_scoped:
        return None                              # compiler default is enough
    try:
        cap = pltpu.get_tpu_info().vmem_capacity_bytes
    except Exception:
        cap = 64 * 1024 * 1024                   # conservative (v7x per-TC)
    return int(min(need, int(0.85 * cap)))


def _pick_batch_tile(B):
    # 256 fills the v6e/v7x 256-wide MXU N dimension and halves step count;
    # below 512 samples keep the tile at 128 so the "parallel" grid axis still
    # has >= 2 steps to shard across v7x's two TensorCores.  On v5e, N=128
    # already fills the 128-wide MXU, so either choice is fine there.
    if B >= 512:
        return 256
    return 128


def discriminator_forward(x, params, *, batch_tile=None):
    """x: [B, nin] f32; params in PyTorch layout: W[out, in], b[out]."""
    w1, b1, w2, b2, w3, b3 = params
    nh1, nin = w1.shape
    nh2 = w2.shape[0]
    B = x.shape[0]
    if batch_tile is None:
        batch_tile = _pick_batch_tile(B)
    assert batch_tile % 128 == 0, "batch_tile must be a multiple of 128 (lanes)"

    num_tiles = pl.cdiv(B, batch_tile)
    b_pad = num_tiles * batch_tile

    # x stays untransposed & f32: only a cheap row-pad when B % tile != 0.
    xp = x.astype(jnp.float32)
    if b_pad != B:
        xp = jnp.pad(xp, ((0, b_pad - B), (0, 0)))

    w1_bf = w1.astype(jnp.bfloat16)                               # [nh1, nin]
    w2_bf = w2.astype(jnp.bfloat16)                               # [nh2, nh1]
    b1c = b1.reshape(nh1, 1).astype(jnp.float32)
    b2c = b2.reshape(nh2, 1).astype(jnp.float32)
    w3c = w3.reshape(nh2, 1).astype(jnp.float32)                  # W3.T column
    b3s = b3.reshape(1).astype(jnp.float32)

    def resident_spec(shape, single_buffer):
        idx = lambda i: (0,) * len(shape)
        if single_buffer:
            # Constant index_map -> no point double-buffering; reclaim VMEM.
            return pl.BlockSpec(shape, idx, pipeline_mode=pl.Buffered(1))
        return pl.BlockSpec(shape, idx)

    def run(single_buffer):
        in_specs = [
            pl.BlockSpec((batch_tile, nin), lambda i: (i, 0)),        # x tile
            resident_spec((nh1, nin), single_buffer),                 # W1
            resident_spec((nh1, 1), single_buffer),                   # b1
            resident_spec((nh2, nh1), single_buffer),                 # W2
            resident_spec((nh2, 1), single_buffer),                   # b2
            resident_spec((nh2, 1), single_buffer),                   # W3.T col
            pl.BlockSpec(memory_space=pltpu.MemorySpace.SMEM),        # b3
        ]
        cp_kwargs = dict(dimension_semantics=("parallel",))
        limit = _vmem_limit_bytes(nin, nh1, nh2, batch_tile, single_buffer)
        if limit is not None:
            cp_kwargs["vmem_limit_bytes"] = limit
        return pl.pallas_call(
            discriminator_kernel,
            out_shape=jax.ShapeDtypeStruct((num_tiles, 1, batch_tile),
                                           jnp.float32),
            grid_spec=pltpu.PrefetchScalarGridSpec(
                num_scalar_prefetch=0,
                grid=(num_tiles,),
                in_specs=in_specs,
                out_specs=pl.BlockSpec((1, 1, batch_tile),
                                       lambda i: (i, 0, 0)),
            ),
            compiler_params=pltpu.CompilerParams(**cp_kwargs),
        )(xp, w1_bf, b1c, w2_bf, b2c, w3c, b3s)

    try:
        out3 = jax.block_until_ready(run(True))
    except Exception:
        # This JAX build rejects pipeline_mode=pl.Buffered(1) on the resident
        # blocks; fall back to the default double-buffered pipeline (the cost
        # is only extra VMEM for the constant weight blocks, not correctness).
        out3 = run(False)

    # (num_tiles, 1, batch_tile) -> (B, 1); drop padded rows.
    return out3.reshape(-1)[:B].reshape(B, 1).astype(x.dtype)


def init_params(key, nin, nh1, nh2, dtype=jnp.float32):
    """PyTorch-nn.Linear-style uniform fan-in init, weights in [out, in]."""
    ks = jax.random.split(key, 6)

    def lin(kw, kb, fan_in, fan_out):
        bound = 1.0 / jnp.sqrt(float(fan_in))
        w = jax.random.uniform(kw, (fan_out, fan_in), dtype, -bound, bound)
        b = jax.random.uniform(kb, (fan_out,), dtype, -bound, bound)
        return w, b

    w1, b1 = lin(ks[0], ks[1], nin, nh1)
    w2, b2 = lin(ks[2], ks[3], nh1, nh2)
    w3, b3 = lin(ks[4], ks[5], nh2, 1)
    return (w1, b1, w2, b2, w3, b3)


def reference_forward(x, params):
    """Pure-JAX reference replicating the kernel numerics (bf16 matmul operands
    for layers 1-2, f32 accumulation and elementwise, f32 final layer)."""
    w1, b1, w2, b2, w3, b3 = params
    bf = jnp.bfloat16
    h1 = jnp.maximum(
        jnp.dot(x.astype(bf), w1.astype(bf).T,
                preferred_element_type=jnp.float32) + b1, 0.0)
    h2 = jnp.maximum(
        jnp.dot(h1.astype(bf), w2.astype(bf).T,
                preferred_element_type=jnp.float32) + b2, 0.0)
    return jax.nn.sigmoid(jnp.dot(h2, w3.T) + b3)


if __name__ == "__main__":
    # Original module shapes: nin=784, nh1=3920, nh2=40, out=1 — scaled down
    # for a quick smoke test.  B=256 gives two "parallel" grid steps
    # (exercises the 2-TC split on v7x); B=200 exercises the batch-pad path.
    NIN, NH1, NH2 = 64, 128, 32

    key = jax.random.PRNGKey(0)
    kx, kp = jax.random.split(key)
    params = init_params(kp, NIN, NH1, NH2)

    for B in (256, 200):
        x = jax.random.normal(jax.random.fold_in(kx, B), (B, NIN), jnp.float32)
        out = jax.block_until_ready(discriminator_forward(x, params))
        ref = reference_forward(x, params)
        assert out.shape == (B, 1)
        assert jnp.allclose(out, ref, atol=2e-2, rtol=2e-2), f"mismatch B={B}"

    print("KERNEL_OK")
</pallas_src>

<mosaic_0001>
module attributes {stable_mosaic.version = 11 : i64} {
  func.func @discriminator_kernel(%arg0: i32, %arg1: memref<128x64xf32, #tpu.memory_space<vmem>>, %arg2: memref<128x64xbf16, #tpu.memory_space<vmem>>, %arg3: memref<128x1xf32, #tpu.memory_space<vmem>>, %arg4: memref<32x128xbf16, #tpu.memory_space<vmem>>, %arg5: memref<32x1xf32, #tpu.memory_space<vmem>>, %arg6: memref<32x1xf32, #tpu.memory_space<vmem>>, %arg7: memref<1xf32, #tpu.memory_space<smem>>, %arg8: memref<1x1x128xf32, #tpu.memory_space<vmem>>) attributes {dimension_semantics = [#tpu.dimension_semantics<parallel>], iteration_bounds = array<i64: 2>, scalar_prefetch = 0 : i64, scratch_operands = 0 : i64, tpu.core_type = #tpu.core_type<tc>, window_params = [{transform_indices = @transform_0, window_bounds = array<i64: 128, 64>}, {pipeline_mode = #tpu.pipeline_mode<synchronous>, transform_indices = @transform_1, window_bounds = array<i64: 128, 64>}, {pipeline_mode = #tpu.pipeline_mode<synchronous>, transform_indices = @transform_2, window_bounds = array<i64: 128, 1>}, {pipeline_mode = #tpu.pipeline_mode<synchronous>, transform_indices = @transform_3, window_bounds = array<i64: 32, 128>}, {pipeline_mode = #tpu.pipeline_mode<synchronous>, transform_indices = @transform_4, window_bounds = array<i64: 32, 1>}, {pipeline_mode = #tpu.pipeline_mode<synchronous>, transform_indices = @transform_5, window_bounds = array<i64: 32, 1>}, {transform_indices = @transform_6, window_bounds = array<i64: 1>}, {transform_indices = @transform_7, window_bounds = array<i64: 1, 1, 128>}]} {
    %c0 = arith.constant 0 : index
    %c0_0 = arith.constant 0 : index
    %0 = vector.load %arg1[%c0, %c0_0] : memref<128x64xf32, #tpu.memory_space<vmem>>, vector<128x64xf32>
    %1 = arith.truncf %0 : vector<128x64xf32> to vector<128x64xbf16>
    %c0_1 = arith.constant 0 : index
    %c0_2 = arith.constant 0 : index
    %2 = vector.load %arg2[%c0_1, %c0_2] : memref<128x64xbf16, #tpu.memory_space<vmem>>, vector<128x64xbf16>
    %cst = arith.constant dense<0.000000e+00> : vector<128x128xf32>
    %3 = tpu.matmul %2, %1, %cst {dimension_numbers = #tpu.dot_dimension_numbers<[1], [1], [0], [0], [0, 0, 1, 0], [], []>} : vector<128x64xbf16>, vector<128x64xbf16>, vector<128x128xf32> -> vector<128x128xf32>
    %c0_3 = arith.constant 0 : index
    %c0_4 = arith.constant 0 : index
    %4 = vector.load %arg3[%c0_3, %c0_4] : memref<128x1xf32, #tpu.memory_space<vmem>>, vector<128x1xf32>
    %5 = vector.broadcast %4 : vector<128x1xf32> to vector<128x128xf32>
    %6 = arith.addf %3, %5 : vector<128x128xf32>
    %cst_5 = arith.constant 0.000000e+00 : f32
    %7 = vector.broadcast %cst_5 : f32 to vector<128x128xf32>
    %8 = arith.maximumf %6, %7 : vector<128x128xf32>
    %9 = arith.truncf %8 : vector<128x128xf32> to vector<128x128xbf16>
    %c0_6 = arith.constant 0 : index
    %c0_7 = arith.constant 0 : index
    %10 = vector.load %arg4[%c0_6, %c0_7] : memref<32x128xbf16, #tpu.memory_space<vmem>>, vector<32x128xbf16>
    %cst_8 = arith.constant dense<0.000000e+00> : vector<32x128xf32>
    %11 = tpu.matmul %10, %9, %cst_8 {dimension_numbers = #tpu.dot_dimension_numbers<[1], [0], [0], [1], [0, 0, 1, 1], [], []>} : vector<32x128xbf16>, vector<128x128xbf16>, vector<32x128xf32> -> vector<32x128xf32>
    %c0_9 = arith.constant 0 : index
    %c0_10 = arith.constant 0 : index
    %12 = vector.load %arg5[%c0_9, %c0_10] : memref<32x1xf32, #tpu.memory_space<vmem>>, vector<32x1xf32>
    %13 = vector.broadcast %12 : vector<32x1xf32> to vector<32x128xf32>
    %14 = arith.addf %11, %13 : vector<32x128xf32>
    %cst_11 = arith.constant 0.000000e+00 : f32
    %15 = vector.broadcast %cst_11 : f32 to vector<32x128xf32>
    %16 = arith.maximumf %14, %15 : vector<32x128xf32>
    %c0_12 = arith.constant 0 : index
    %c0_13 = arith.constant 0 : index
    %17 = vector.load %arg6[%c0_12, %c0_13] : memref<32x1xf32, #tpu.memory_space<vmem>>, vector<32x1xf32>
    %18 = vector.broadcast %17 : vector<32x1xf32> to vector<32x128xf32>
    %19 = arith.mulf %16, %18 : vector<32x128xf32>
    %cst_14 = arith.constant dense<0.000000e+00> : vector<128xf32>
    %20 = vector.multi_reduction <add>, %19, %cst_14 [0] : vector<32x128xf32> to vector<128xf32>
    %21 = vector.shape_cast %20 : vector<128xf32> to vector<1x128xf32>
    %c0_15 = arith.constant 0 : index
    %22 = memref.load %arg7[%c0_15] : memref<1xf32, #tpu.memory_space<smem>>
    %23 = vector.broadcast %22 : f32 to vector<1x128xf32>
    %24 = arith.addf %21, %23 : vector<1x128xf32>
    %25 = arith.negf %24 : vector<1x128xf32>
    %26 = math.exp %25 : vector<1x128xf32>
    %cst_16 = arith.constant 1.000000e+00 : f32
    %27 = vector.broadcast %cst_16 : f32 to vector<1x128xf32>
    %28 = arith.addf %27, %26 : vector<1x128xf32>
    %29 = arith.divf %27, %28 : vector<1x128xf32>
    %c0_17 = arith.constant 0 : index
    %c0_18 = arith.constant 0 : index
    %c0_19 = arith.constant 0 : index
    %30 = vector.load %arg8[%c0_17, %c0_18, %c0_19] : memref<1x1x128xf32, #tpu.memory_space<vmem>>, vector<1x1x128xf32>
    %31 = vector.shape_cast %30 : vector<1x1x128xf32> to vector<1x128xf32>
    %32 = vector.shape_cast %29 : vector<1x128xf32> to vector<1x1x128xf32>
    tpu.vector_store %arg8[%c0_17, %c0_18, %c0_19], %32 {strides = array<i32>} : memref<1x1x128xf32, #tpu.memory_space<vmem>>, vector<1x1x128xf32>,
    return
  }
  func.func @transform_0(%arg0: i32) -> (i32, i32) {
    %c0_i32 = arith.constant 0 : i32
    %c0_i32_0 = arith.constant 0 : i32
    return %arg0, %c0_i32 : i32, i32
  }
  func.func @transform_1(%arg0: i32) -> (i32, i32) {
    %c0_i32 = arith.constant 0 : i32
    %c0_i32_0 = arith.constant 0 : i32
    %c0_i32_1 = arith.constant 0 : i32
    return %c0_i32, %c0_i32_0 : i32, i32
  }
  func.func @transform_2(%arg0: i32) -> (i32, i32) {
    %c0_i32 = arith.constant 0 : i32
    %c0_i32_0 = arith.constant 0 : i32
    %c0_i32_1 = arith.constant 0 : i32
    return %c0_i32, %c0_i32_0 : i32, i32
  }
  func.func @transform_3(%arg0: i32) -> (i32, i32) {
    %c0_i32 = arith.constant 0 : i32
    %c0_i32_0 = arith.constant 0 : i32
    %c0_i32_1 = arith.constant 0 : i32
    return %c0_i32, %c0_i32_0 : i32, i32
  }
  func.func @transform_4(%arg0: i32) -> (i32, i32) {
    %c0_i32 = arith.constant 0 : i32
    %c0_i32_0 = arith.constant 0 : i32
    %c0_i32_1 = arith.constant 0 : i32
    return %c0_i32, %c0_i32_0 : i32, i32
  }
  func.func @transform_5(%arg0: i32) -> (i32, i32) {
    %c0_i32 = arith.constant 0 : i32
    %c0_i32_0 = arith.constant 0 : i32
    %c0_i32_1 = arith.constant 0 : i32
    return %c0_i32, %c0_i32_0 : i32, i32
  }
  func.func @transform_6(%arg0: i32) -> i32 {
    %c0_i32 = arith.constant 0 : i32
    %c0_i32_0 = arith.constant 0 : i32
    return %c0_i32 : i32
  }
  func.func @transform_7(%arg0: i32) -> (i32, i32, i32) {
    %c0_i32 = arith.constant 0 : i32
    %c0_i32_0 = arith.constant 0 : i32
    %c0_i32_1 = arith.constant 0 : i32
    return %arg0, %c0_i32, %c0_i32_0 : i32, i32, i32
  }
}

module attributes {stable_mosaic.version = 11 : i64} {
  func.func @discriminator_kernel(%arg0: i32, %arg1: memref<128x64xf32, #tpu.memory_space<vmem>>, %arg2: memref<128x64xbf16, #tpu.memory_space<vmem>>, %arg3: memref<128x1xf32, #tpu.memory_space<vmem>>, %arg4: memref<32x128xbf16, #tpu.memory_space<vmem>>, %arg5: memref<32x1xf32, #tpu.memory_space<vmem>>, %arg6: memref<32x1xf32, #tpu.memory_space<vmem>>, %arg7: memref<1xf32, #tpu.memory_space<smem>>, %arg8: memref<1x1x128xf32, #tpu.memory_space<vmem>>) attributes {dimension_semantics = [#tpu.dimension_semantics<parallel>], iteration_bounds = array<i64: 2>, scalar_prefetch = 0 : i64, scratch_operands = 0 : i64, tpu.core_type = #tpu.core_type<tc>, window_params = [{transform_indices = @transform_0, window_bounds = array<i64: 128, 64>}, {pipeline_mode = #tpu.pipeline_mode<synchronous>, transform_indices = @transform_1, window_bounds = array<i64: 128, 64>}, {pipeline_mode = #tpu.pipeline_mode<synchronous>, transform_indices = @transform_2, window_bounds = array<i64: 128, 1>}, {pipeline_mode = #tpu.pipeline_mode<synchronous>, transform_indices = @transform_3, window_bounds = array<i64: 32, 128>}, {pipeline_mode = #tpu.pipeline_mode<synchronous>, transform_indices = @transform_4, window_bounds = array<i64: 32, 1>}, {pipeline_mode = #tpu.pipeline_mode<synchronous>, transform_indices = @transform_5, window_bounds = array<i64: 32, 1>}, {transform_indices = @transform_6, window_bounds = array<i64: 1>}, {transform_indices = @transform_7, window_bounds = array<i64: 1, 1, 128>}]} {
    %c0 = arith.constant 0 : index
    %c0_0 = arith.constant 0 : index
    %0 = vector.load %arg1[%c0, %c0_0] : memref<128x64xf32, #tpu.memory_space<vmem>>, vector<128x64xf32>
    %1 = arith.truncf %0 : vector<128x64xf32> to vector<128x64xbf16>
    %c0_1 = arith.constant 0 : index
    %c0_2 = arith.constant 0 : index
    %2 = vector.load %arg2[%c0_1, %c0_2] : memref<128x64xbf16, #tpu.memory_space<vmem>>, vector<128x64xbf16>
    %cst = arith.constant dense<0.000000e+00> : vector<128x128xf32>
    %3 = tpu.matmul %2, %1, %cst {dimension_numbers = #tpu.dot_dimension_numbers<[1], [1], [0], [0], [0, 0, 1, 0], [], []>} : vector<128x64xbf16>, vector<128x64xbf16>, vector<128x128xf32> -> vector<128x128xf32>
    %c0_3 = arith.constant 0 : index
    %c0_4 = arith.constant 0 : index
    %4 = vector.load %arg3[%c0_3, %c0_4] : memref<128x1xf32, #tpu.memory_space<vmem>>, vector<128x1xf32>
    %5 = vector.broadcast %4 : vector<128x1xf32> to vector<128x128xf32>
    %6 = arith.addf %3, %5 : vector<128x128xf32>
    %cst_5 = arith.constant 0.000000e+00 : f32
    %7 = vector.broadcast %cst_5 : f32 to vector<128x128xf32>
    %8 = arith.maximumf %6, %7 : vector<128x128xf32>
    %9 = arith.truncf %8 : vector<128x128xf32> to vector<128x128xbf16>
    %c0_6 = arith.constant 0 : index
    %c0_7 = arith.constant 0 : index
    %10 = vector.load %arg4[%c0_6, %c0_7] : memref<32x128xbf16, #tpu.memory_space<vmem>>, vector<32x128xbf16>
    %cst_8 = arith.constant dense<0.000000e+00> : vector<32x128xf32>
    %11 = tpu.matmul %10, %9, %cst_8 {dimension_numbers = #tpu.dot_dimension_numbers<[1], [0], [0], [1], [0, 0, 1, 1], [], []>} : vector<32x128xbf16>, vector<128x128xbf16>, vector<32x128xf32> -> vector<32x128xf32>
    %c0_9 = arith.constant 0 : index
    %c0_10 = arith.constant 0 : index
    %12 = vector.load %arg5[%c0_9, %c0_10] : memref<32x1xf32, #tpu.memory_space<vmem>>, vector<32x1xf32>
    %13 = vector.broadcast %12 : vector<32x1xf32> to vector<32x128xf32>
    %14 = arith.addf %11, %13 : vector<32x128xf32>
    %cst_11 = arith.constant 0.000000e+00 : f32
    %15 = vector.broadcast %cst_11 : f32 to vector<32x128xf32>
    %16 = arith.maximumf %14, %15 : vector<32x128xf32>
    %c0_12 = arith.constant 0 : index
    %c0_13 = arith.constant 0 : index
    %17 = vector.load %arg6[%c0_12, %c0_13] : memref<32x1xf32, #tpu.memory_space<vmem>>, vector<32x1xf32>
    %18 = vector.broadcast %17 : vector<32x1xf32> to vector<32x128xf32>
    %19 = arith.mulf %16, %18 : vector<32x128xf32>
    %cst_14 = arith.constant dense<0.000000e+00> : vector<128xf32>
    %20 = vector.multi_reduction <add>, %19, %cst_14 [0] : vector<32x128xf32> to vector<128xf32>
    %21 = vector.shape_cast %20 : vector<128xf32> to vector<1x128xf32>
    %c0_15 = arith.constant 0 : index
    %22 = memref.load %arg7[%c0_15] : memref<1xf32, #tpu.memory_space<smem>>
    %23 = vector.broadcast %22 : f32 to vector<1x128xf32>
    %24 = arith.addf %21, %23 : vector<1x128xf32>
    %25 = arith.negf %24 : vector<1x128xf32>
    %26 = math.exp %25 : vector<1x128xf32>
    %cst_16 = arith.constant 1.000000e+00 : f32
    %27 = vector.broadcast %cst_16 : f32 to vector<1x128xf32>
    %28 = arith.addf %27, %26 : vector<1x128xf32>
    %29 = arith.divf %27, %28 : vector<1x128xf32>
    %c0_17 = arith.constant 0 : index
    %c0_18 = arith.constant 0 : index
    %c0_19 = arith.constant 0 : index
    %30 = vector.load %arg8[%c0_17, %c0_18, %c0_19] : memref<1x1x128xf32, #tpu.memory_space<vmem>>, vector<1x1x128xf32>
    %31 = vector.shape_cast %30 : vector<1x1x128xf32> to vector<1x128xf32>
    %32 = vector.shape_cast %29 : vector<1x128xf32> to vector<1x1x128xf32>
    tpu.vector_store %arg8[%c0_17, %c0_18, %c0_19], %32 {strides = array<i32>} : memref<1x1x128xf32, #tpu.memory_space<vmem>>, vector<1x1x128xf32>,
    return
  }
  func.func @transform_0(%arg0: i32) -> (i32, i32) {
    %c0_i32 = arith.constant 0 : i32
    %c0_i32_0 = arith.constant 0 : i32
    return %arg0, %c0_i32 : i32, i32
  }
  func.func @transform_1(%arg0: i32) -> (i32, i32) {
    %c0_i32 = arith.constant 0 : i32
    %c0_i32_0 = arith.constant 0 : i32
    %c0_i32_1 = arith.constant 0 : i32
    return %c0_i32, %c0_i32_0 : i32, i32
  }
  func.func @transform_2(%arg0: i32) -> (i32, i32) {
    %c0_i32 = arith.constant 0 : i32
    %c0_i32_0 = arith.constant 0 : i32
    %c0_i32_1 = arith.constant 0 : i32
    return %c0_i32, %c0_i32_0 : i32, i32
  }
  func.func @transform_3(%arg0: i32) -> (i32, i32) {
    %c0_i32 = arith.constant 0 : i32
    %c0_i32_0 = arith.constant 0 : i32
    %c0_i32_1 = arith.constant 0 : i32
    return %c0_i32, %c0_i32_0 : i32, i32
  }
  func.func @transform_4(%arg0: i32) -> (i32, i32) {
    %c0_i32 = arith.constant 0 : i32
    %c0_i32_0 = arith.constant 0 : i32
    %c0_i32_1 = arith.constant 0 : i32
    return %c0_i32, %c0_i32_0 : i32, i32
  }
  func.func @transform_5(%arg0: i32) -> (i32, i32) {
    %c0_i32 = arith.constant 0 : i32
    %c0_i32_0 = arith.constant 0 : i32
    %c0_i32_1 = arith.constant 0 : i32
    return %c0_i32, %c0_i32_0 : i32, i32
  }
  func.func @transform_6(%arg0: i32) -> i32 {
    %c0_i32 = arith.constant 0 : i32
    %c0_i32_0 = arith.constant 0 : i32
    return %c0_i32 : i32
  }
  func.func @transform_7(%arg0: i32) -> (i32, i32, i32) {
    %c0_i32 = arith.constant 0 : i32
    %c0_i32_0 = arith.constant 0 : i32
    %c0_i32_1 = arith.constant 0 : i32
    return %arg0, %c0_i32, %c0_i32_0 : i32, i32, i32
  }
}

</mosaic_0001>

<llo_original>
// kernel: tpu_custom_call.1
$region0: #{tpu_custom_call.1}
  #allocation0 [shape = 'u32[]', space=smem, size = 0x4, offset = 0x4, fixed_abs, tag = 'smem constant byte address 0x4 - core index']
  #allocation1 [shape = 'u32[144,128]{1,0:T(1,128)}', space=vmem, size = 0x12000, scoped, tag = 'internal scratch']
  #allocation2 [shape = 'f32[1]{0:T(128)S(6)}', space=smem, size = 0x200, scoped, tag = 'scoped memory for tpu_custom_call.1']
  %s0 = inlined_call_operand.vmem [shape: f32[256,64], index: 0, kind: input, shape index: {}]
  %s1 = inlined_call_operand.vmem [shape: bf16[128,64], index: 1, kind: input, shape index: {}]
  %s2 = inlined_call_operand.vmem [shape: f32[128,1], index: 2, kind: input, shape index: {}]
  %s3 = inlined_call_operand.vmem [shape: bf16[32,128], index: 3, kind: input, shape index: {}]
  %s4 = inlined_call_operand.vmem [shape: f32[32,1], index: 4, kind: input, shape index: {}]
  %s5 = inlined_call_operand.vmem [shape: f32[32,1], index: 5, kind: input, shape index: {}]
  %s6 = inlined_call_operand.<no memory space> [shape: f32[1], index: 6, kind: input, shape index: {}]
  %s7 = inlined_call_operand.hbm [shape: f32[2,1,128], index: 7, kind: output, shape index: {}]
  %s8 = sld [smem:[#allocation0]]
  $region61: #{tpu_custom_call.1} parent=0
    _
  %s10 = ssub.s32 1, %s8
  %s11 = scalar_select 0, %s10, %s8
  %12 = sst [smem:[#allocation2]] %s6
  $region1: #{tpu_custom_call.1} parent=0
    #allocation3 [shape = 'u8[1024]{0}', space=vmem, size = 0x400, scoped, tag = 'output window, operand 0']
    #allocation4 [shape = 's32[2]{0}', space=sflag, size = 0x8, scoped, tag = 'scoped memory for tpu_custom_call.1']
    %13 = vsyncpa [#allocation4], 0
    %s14 = scalar_lea.sflag [#allocation4], 1
    %15 = vsyncpa %s14, 0
    loop: start=0, step=1, limit=4
    $region2: #{tpu_custom_call.1} parent=1 // loop_pre_header
      _
    $region3: #{tpu_custom_call.1} parent=1 // loop_header
      %s17 = sphi 0, %s21
      %p18 = scmp.ge.s32.totalorder %s17, 4
      %s27 = sphi 0, %s29
      %s30 = sphi 0, %s27
      %s31 = sphi 0, %s30
      %s47 = sphi 0, %s31
      %s51 = sphi 0, %s51
      %s53 = sphi 0, %s51
      %s54 = sphi 0, %s53
      %s68 = sphi 0, %s54
      %s72 = sphi 0, %s72
      %s74 = sphi 0, %s72
      %s75 = sphi 0, %s74
      %s89 = sphi 0, %s75
      %s93 = sphi 0, %s93
      %s95 = sphi 0, %s93
      %s96 = sphi 0, %s95
      %s110 = sphi 0, %s96
      %s114 = sphi 0, %s114
      %s116 = sphi 0, %s114
      %s117 = sphi 0, %s116
      %s131 = sphi 0, %s117
      %s135 = sphi 0, %s135
      %s137 = sphi 0, %s135
      %s138 = sphi 0, %s137
      %s152 = sphi 0, %s138
      %s156 = sphi 0, %s156
      %s158 = sphi 0, %s156
      %s159 = sphi 0, %s158
      %s173 = sphi 0, %s159
      %s179 = sphi 0, %s181
      %s182 = sphi 0, %s179
      %s183 = sphi 0, %s182
      %s199 = sphi 0, %s183
    $region4: #{tpu_custom_call.1} parent=1 // loop_header_branch
      %20 = sbr.rel (%p18) target = $region8
    $region5: #{tpu_custom_call.1} parent=1 // loop_body
      %s22 = ssub.s32 %s17, 1
      %s23 = ssub.s32 %s17, 2
      %s24 = sadd.s32 %s17, 1
      %s25 = ssub.s32 %s17, %s24
      %p26 = scmp.eq.s32.totalorder %s25, 0
      %s28 = sadd.s32 %s27, 1
      %s29 = scalar_select %p26, %s27, %s28
      %p32 = pneg %p26
      %p33 = scmp.eq.s32.totalorder %s17, 1
      %p34 = por %p32, %p33
      %p35 = scmp.ne.s32.totalorder %s27, %s30
      %p36 = scmp.eq.s32.totalorder %s17, 0
      %p37 = por %p35, %p36
      %p38 = scmp.ne.s32.totalorder %s27, %s30
      %p39 = scmp.eq.s32.totalorder %s22, 1
      %p40 = por %p38, %p39
      %p41 = scmp.ne.s32.totalorder %s30, %s31
      %p42 = scmp.eq.s32.totalorder %s22, 0
      %p43 = por %p41, %p42
      %p44 = scmp.ne.s32.totalorder %s30, %s31
      %p45 = scmp.eq.s32.totalorder %s23, 1
      %p46 = por %p44, %p45
      %p48 = scmp.ne.s32.totalorder %s31, %s47
      %p49 = scmp.eq.s32.totalorder %s23, 0
      %p50 = por %p48, %p49
      %s52 = sadd.s32 %s51, 1
      %p55 = scmp.eq.s32.totalorder %s17, 1
      %p56 = scmp.ne.s32.totalorder %s51, %s53
      %p57 = scmp.eq.s32.totalorder %s17, 0
      %p58 = por %p56, %p57
      %p59 = scmp.ne.s32.totalorder %s51, %s53
      %p60 = scmp.eq.s32.totalorder %s22, 1
      %p61 = por %p59, %p60
      %p62 = scmp.ne.s32.totalorder %s53, %s54
      %p63 = scmp.eq.s32.totalorder %s22, 0
      %p64 = por %p62, %p63
      %p65 = scmp.ne.s32.totalorder %s53, %s54
      %p66 = scmp.eq.s32.totalorder %s23, 1
      %p67 = por %p65, %p66
      %p69 = scmp.ne.s32.totalorder %s54, %s68
      %p70 = scmp.eq.s32.totalorder %s23, 0
      %p71 = por %p69, %p70
      %s73 = sadd.s32 %s72, 1
      %p76 = scmp.eq.s32.totalorder %s17, 1
      %p77 = scmp.ne.s32.totalorder %s72, %s74
      %p78 = scmp.eq.s32.totalorder %s17, 0
      %p79 = por %p77, %p78
      %p80 = scmp.ne.s32.totalorder %s72, %s74
      %p81 = scmp.eq.s32.totalorder %s22, 1
      %p82 = por %p80, %p81
      %p83 = scmp.ne.s32.totalorder %s74, %s75
      %p84 = scmp.eq.s32.totalorder %s22, 0
      %p85 = por %p83, %p84
      %p86 = scmp.ne.s32.totalorder %s74, %s75
      %p87 = scmp.eq.s32.totalorder %s23, 1
      %p88 = por %p86, %p87
      %p90 = scmp.ne.s32.totalorder %s75, %s89
      %p91 = scmp.eq.s32.totalorder %s23, 0
      %p92 = por %p90, %p91
      %s94 = sadd.s32 %s93, 1
      %p97 = scmp.eq.s32.totalorder %s17, 1
      %p98 = scmp.ne.s32.totalorder %s93, %s95
      %p99 = scmp.eq.s32.totalorder %s17, 0
      %p100 = por %p98, %p99
      %p101 = scmp.ne.s32.totalorder %s93, %s95
      %p102 = scmp.eq.s32.totalorder %s22, 1
      %p103 = por %p101, %p102
      %p104 = scmp.ne.s32.totalorder %s95, %s96
      %p105 = scmp.eq.s32.totalorder %s22, 0
      %p106 = por %p104, %p105
      %p107 = scmp.ne.s32.totalorder %s95, %s96
      %p108 = scmp.eq.s32.totalorder %s23, 1
      %p109 = por %p107, %p108
      %p111 = scmp.ne.s32.totalorder %s96, %s110
      %p112 = scmp.eq.s32.totalorder %s23, 0
      %p113 = por %p111, %p112
      %s115 = sadd.s32 %s114, 1
      %p118 = scmp.eq.s32.totalorder %s17, 1
      %p119 = scmp.ne.s32.totalorder %s114, %s116
      %p120 = scmp.eq.s32.totalorder %s17, 0
      %p121 = por %p119, %p120
      %p122 = scmp.ne.s32.totalorder %s114, %s116
      %p123 = scmp.eq.s32.totalorder %s22, 1
      %p124 = por %p122, %p123
      %p125 = scmp.ne.s32.totalorder %s116, %s117
      %p126 = scmp.eq.s32.totalorder %s22, 0
      %p127 = por %p125, %p126
      %p128 = scmp.ne.s32.totalorder %s116, %s117
      %p129 = scmp.eq.s32.totalorder %s23, 1
      %p130 = por %p128, %p129
      %p132 = scmp.ne.s32.totalorder %s117, %s131
      %p133 = scmp.eq.s32.totalorder %s23, 0
      %p134 = por %p132, %p133
      %s136 = sadd.s32 %s135, 1
      %p139 = scmp.eq.s32.totalorder %s17, 1
      %p140 = scmp.ne.s32.totalorder %s135, %s137
      %p141 = scmp.eq.s32.totalorder %s17, 0
      %p142 = por %p140, %p141
      %p143 = scmp.ne.s32.totalorder %s135, %s137
      %p144 = scmp.eq.s32.totalorder %s22, 1
      %p145 = por %p143, %p144
      %p146 = scmp.ne.s32.totalorder %s137, %s138
      %p147 = scmp.eq.s32.totalorder %s22, 0
      %p148 = por %p146, %p147
      %p149 = scmp.ne.s32.totalorder %s137, %s138
      %p150 = scmp.eq.s32.totalorder %s23, 1
      %p151 = por %p149, %p150
      %p153 = scmp.ne.s32.totalorder %s138, %s152
      %p154 = scmp.eq.s32.totalorder %s23, 0
      %p155 = por %p153, %p154
      %s157 = sadd.s32 %s156, 1
      %p160 = scmp.eq.s32.totalorder %s17, 1
      %p161 = scmp.ne.s32.totalorder %s156, %s158
      %p162 = scmp.eq.s32.totalorder %s17, 0
      %p163 = por %p161, %p162
      %p164 = scmp.ne.s32.totalorder %s156, %s158
      %p165 = scmp.eq.s32.totalorder %s22, 1
      %p166 = por %p164, %p165
      %p167 = scmp.ne.s32.totalorder %s158, %s159
      %p168 = scmp.eq.s32.totalorder %s22, 0
      %p169 = por %p167, %p168
      %p170 = scmp.ne.s32.totalorder %s158, %s159
      %p171 = scmp.eq.s32.totalorder %s23, 1
      %p172 = por %p170, %p171
      %p174 = scmp.ne.s32.totalorder %s159, %s173
      %p175 = scmp.eq.s32.totalorder %s23, 0
      %p176 = por %p174, %p175
      %s177 = ssub.s32 %s17, %s24
      %p178 = scmp.eq.s32.totalorder %s177, 0
      %s180 = sadd.s32 %s179, 1
      %s181 = scalar_select %p178, %s179, %s180
      %p184 = pneg %p178
      %p185 = scmp.eq.s32.totalorder %s17, 1
      %p186 = por %p184, %p185
      %p187 = scmp.ne.s32.totalorder %s179, %s182
      %p188 = scmp.eq.s32.totalorder %s17, 0
      %p189 = por %p187, %p188
      %p190 = scmp.ne.s32.totalorder %s179, %s182
      %p191 = scmp.eq.s32.totalorder %s22, 1
      %p192 = por %p190, %p191
      %p193 = scmp.ne.s32.totalorder %s182, %s183
      %p194 = scmp.eq.s32.totalorder %s22, 0
      %p195 = por %p193, %p194
      %p196 = scmp.ne.s32.totalorder %s182, %s183
      %p197 = scmp.eq.s32.totalorder %s23, 1
      %p198 = por %p196, %p197
      %p200 = scmp.ne.s32.totalorder %s183, %s199
      %p201 = scmp.eq.s32.totalorder %s23, 0
      %p202 = por %p200, %p201
      %p203 = scmp.le.s32.totalorder 1, %s17
      %p204 = scmp.lt.s32.totalorder %s17, 3
      %p205 = pnand %p203, %p204
      %p206 = pneg %p205
      // Predicated region
      $region9: #{tpu_custom_call.1} parent=5 // pred_check
        _
      $region10: #{tpu_custom_call.1} parent=5 // pred_check_branch
        %208 = sbr.rel (%p205) target = $region12
      $region11: #{tpu_custom_call.1} parent=5 // pred_region
        %s209 = ssub.s32 %s17, 1
        // Predicated region
        $region13: #{tpu_custom_call.1} parent=11 // pred_check
          %p210 = pneg %p64
        $region14: #{tpu_custom_call.1} parent=11 // pred_check_branch
          %212 = sbr.rel (%p210) target = $region16
        $region15: #{tpu_custom_call.1} parent=11 // pred_region
          _
        $region16: #{tpu_custom_call.1} parent=11 // pred_fallthru
          _
        // Predicated region
        $region17: #{tpu_custom_call.1} parent=11 // pred_check
          %p213 = pneg %p85
        $region18: #{tpu_custom_call.1} parent=11 // pred_check_branch
          %215 = sbr.rel (%p213) target = $region20
        $region19: #{tpu_custom_call.1} parent=11 // pred_region
          _
        $region20: #{tpu_custom_call.1} parent=11 // pred_fallthru
          _
        // Predicated region
        $region21: #{tpu_custom_call.1} parent=11 // pred_check
          %p216 = pneg %p106
        $region22: #{tpu_custom_call.1} parent=11 // pred_check_branch
          %218 = sbr.rel (%p216) target = $region24
        $region23: #{tpu_custom_call.1} parent=11 // pred_region
          _
        $region24: #{tpu_custom_call.1} parent=11 // pred_fallthru
          _
        // Predicated region
        $region25: #{tpu_custom_call.1} parent=11 // pred_check
          %p219 = pneg %p127
        $region26: #{tpu_custom_call.1} parent=11 // pred_check_branch
          %221 = sbr.rel (%p219) target = $region28
        $region27: #{tpu_custom_call.1} parent=11 // pred_region
          _
        $region28: #{tpu_custom_call.1} parent=11 // pred_fallthru
          _
        // Predicated region
        $region29: #{tpu_custom_call.1} parent=11 // pred_check
          %p222 = pneg %p148
        $region30: #{tpu_custom_call.1} parent=11 // pred_check_branch
          %224 = sbr.rel (%p222) target = $region32
        $region31: #{tpu_custom_call.1} parent=11 // pred_region
          _
        $region32: #{tpu_custom_call.1} parent=11 // pred_fallthru
          _
        // Predicated region
        $region33: #{tpu_custom_call.1} parent=11 // pred_check
          %p225 = pneg %p169
        $region34: #{tpu_custom_call.1} parent=11 // pred_check_branch
          %227 = sbr.rel (%p225) target = $region36
        $region35: #{tpu_custom_call.1} parent=11 // pred_region
          _
        $region36: #{tpu_custom_call.1} parent=11 // pred_fallthru
          _
      $region12: #{tpu_custom_call.1} parent=5 // pred_fallthru
        _
      %p228 = scmp.lt.s32.totalorder %s17, 2
      // Predicated region
      $region37: #{tpu_custom_call.1} parent=5 // pred_check
        %p229 = pneg %p228
      $region38: #{tpu_custom_call.1} parent=5 // pred_check_branch
        %231 = sbr.rel (%p229) target = $region40
      $region39: #{tpu_custom_call.1} parent=5 // pred_region
        // Predicated region
        $region41: #{tpu_custom_call.1} parent=39 // pred_check
          %p232 = pneg %p37
        $region42: #{tpu_custom_call.1} parent=39 // pred_check_branch
          %234 = sbr.rel (%p232) target = $region44
        $region43: #{tpu_custom_call.1} parent=39 // pred_region
          %s235 = smul.u32 16, %s17
          %p236 = scmp.lt.s32.totalorder %s235, 31
          %s237 = scalar_select %p236, %s235, 31
          %s238 = smul.addr %s237, 8
          %s239 = scalar_lea.vmem %s0, %s238
          %s240 = smul.u32 16, %s17
        $region44: #{tpu_custom_call.1} parent=39 // pred_fallthru
          _
      $region40: #{tpu_custom_call.1} parent=5 // pred_fallthru
        _
      %p241 = scmp.le.s32.totalorder 1, %s17
      %p242 = scmp.lt.s32.totalorder %s17, 3
      %p243 = pnand %p241, %p242
      %p244 = pneg %p243
      // Predicated region
      $region45: #{tpu_custom_call.1} parent=5 // pred_check
        _
      $region46: #{tpu_custom_call.1} parent=5 // pred_check_branch
        %246 = sbr.rel (%p243) target = $region48
      $region47: #{tpu_custom_call.1} parent=5 // pred_region
        %s247 = ssub.s32 %s17, 1
        %s248 = smul.u32 16, %s22
        %p249 = scmp.lt.s32.totalorder %s248, 31
        %s250 = scalar_select %p249, %s248, 31
        %s251 = smul.addr %s250, 8
        %s252 = scalar_lea.vmem %s0, %s251
        %p253 = pneg %p43
        %p254 = pneg %p40
        %p255 = pneg %p64
        %p256 = pneg %p61
        %p257 = pneg %p85
        %p258 = pneg %p82
        %p259 = pneg %p106
        %p260 = pneg %p103
        %p261 = pneg %p127
        %p262 = pneg %p124
        %p263 = pneg %p148
        %p264 = pneg %p145
        %p265 = pneg %p169
        %p266 = pneg %p166
        %p267 = pneg %p195
        %p268 = pneg %p192
        %s269 = sand.u32 %s182, 1
        %s270 = scalar_lea.sflag [#allocation4], %s269
        %s271 = sand.u32 %s182, 1
        %s272 = scalar_lea.vmem [#allocation3], %s271
        %s273 = smul.u32 16, %s22
        %p274 = scmp.lt.s32.totalorder %s273, 31
        %s275 = scalar_select %p274, %s273, 31
        %s276 = smul.addr %s275, 8
        %s277 = scalar_lea.vmem %s0, %s276
        %s278 = smul.u32 16, %s22
        %v280 = vld [vmem:[%s277] sm:$0xff]
        %v281 = vld [vmem:[%s277 + $0x8] sm:$0xff]
        %v282 = vld [vmem:[%s277 + $0x10] sm:$0xff]
        %v283 = vld [vmem:[%s277 + $0x18] sm:$0xff]
        %v284 = vld [vmem:[%s277 + $0x20] sm:$0xff]
        %v285 = vld [vmem:[%s277 + $0x28] sm:$0xff]
        %v286 = vld [vmem:[%s277 + $0x30] sm:$0xff]
        %v287 = vld [vmem:[%s277 + $0x38] sm:$0xff]
        %v288 = vld [vmem:[%s277 + $0x40] sm:$0xff]
        %v289 = vld [vmem:[%s277 + $0x48] sm:$0xff]
        %v290 = vld [vmem:[%s277 + $0x50] sm:$0xff]
        %v291 = vld [vmem:[%s277 + $0x58] sm:$0xff]
        %v292 = vld [vmem:[%s277 + $0x60] sm:$0xff]
        %v293 = vld [vmem:[%s277 + $0x68] sm:$0xff]
        %v294 = vld [vmem:[%s277 + $0x70] sm:$0xff]
        %v295 = vld [vmem:[%s277 + $0x78] sm:$0xff]
        %v296 = vpack.c.bf16 %v281, %v280
        %v297 = vpack.c.bf16 %v283, %v282
        %v298 = vpack.c.bf16 %v285, %v284
        %v299 = vpack.c.bf16 %v287, %v286
        %v300 = vpack.c.bf16 %v289, %v288
        %v301 = vpack.c.bf16 %v291, %v290
        %v302 = vpack.c.bf16 %v293, %v292
        %v303 = vpack.c.bf16 %v295, %v294
        %v304 = vld [vmem:[%s1] sm:$0xf]
        %v305 = vld [vmem:[%s1 + $0x4] sm:$0xf]
        %v306 = vld [vmem:[%s1 + $0x8] sm:$0xf]
        %v307 = vld [vmem:[%s1 + $0xc] sm:$0xf]
        %v308 = vld [vmem:[%s1 + $0x10] sm:$0xf]
        %v309 = vld [vmem:[%s1 + $0x14] sm:$0xf]
        %v310 = vld [vmem:[%s1 + $0x18] sm:$0xf]
        %v311 = vld [vmem:[%s1 + $0x1c] sm:$0xf]
        %v312 = vld [vmem:[%s1 + $0x20] sm:$0xf]
        %v313 = vld [vmem:[%s1 + $0x24] sm:$0xf]
        %v314 = vld [vmem:[%s1 + $0x28] sm:$0xf]
        %v315 = vld [vmem:[%s1 + $0x2c] sm:$0xf]
        %v316 = vld [vmem:[%s1 + $0x30] sm:$0xf]
        %v317 = vld [vmem:[%s1 + $0x34] sm:$0xf]
        %v318 = vld [vmem:[%s1 + $0x38] sm:$0xf]
        %v319 = vld [vmem:[%s1 + $0x3c] sm:$0xf]
        %v320 = vld [vmem:[%s2] sm:$0xff]
        %v321 = vld [vmem:[%s2 + $0x8] sm:$0xff]
        %v322 = vld [vmem:[%s2 + $0x10] sm:$0xff]
        %v323 = vld [vmem:[%s2 + $0x18] sm:$0xff]
        %v324 = vld [vmem:[%s2 + $0x20] sm:$0xff]
        %v325 = vld [vmem:[%s2 + $0x28] sm:$0xff]
        %v326 = vld [vmem:[%s2 + $0x30] sm:$0xff]
        %v327 = vld [vmem:[%s2 + $0x38] sm:$0xff]
        %v328 = vld [vmem:[%s2 + $0x40] sm:$0xff]
        %v329 = vld [vmem:[%s2 + $0x48] sm:$0xff]
        %v330 = vld [vmem:[%s2 + $0x50] sm:$0xff]
        %v331 = vld [vmem:[%s2 + $0x58] sm:$0xff]
        %v332 = vld [vmem:[%s2 + $0x60] sm:$0xff]
        %v333 = vld [vmem:[%s2 + $0x68] sm:$0xff]
        %v334 = vld [vmem:[%s2 + $0x70] sm:$0xff]
        %v335 = vld [vmem:[%s2 + $0x78] sm:$0xff]
        %337 = vset.pattern.permute.xlu0 0
        %338 = vperm.xlu0 %337, %v320
        %v339 = vpop.permute.xlu0 %338
        %342 = vset.pattern.permute.xlu0 0
        %343 = vperm.xlu0 %342, %v321
        %v344 = vpop.permute.xlu0 %343
        %347 = vset.pattern.permute.xlu0 0
        %348 = vperm.xlu0 %347, %v322
        %v349 = vpop.permute.xlu0 %348
        %352 = vset.pattern.permute.xlu0 0
        %353 = vperm.xlu0 %352, %v323
        %v354 = vpop.permute.xlu0 %353
        %357 = vset.pattern.permute.xlu0 0
        %358 = vperm.xlu0 %357, %v324
        %v359 = vpop.permute.xlu0 %358
        %362 = vset.pattern.permute.xlu0 0
        %363 = vperm.xlu0 %362, %v325
        %v364 = vpop.permute.xlu0 %363
        %367 = vset.pattern.permute.xlu0 0
        %368 = vperm.xlu0 %367, %v326
        %v369 = vpop.permute.xlu0 %368
        %372 = vset.pattern.permute.xlu0 0
        %373 = vperm.xlu0 %372, %v327
        %v374 = vpop.permute.xlu0 %373
        %377 = vset.pattern.permute.xlu0 0
        %378 = vperm.xlu0 %377, %v328
        %v379 = vpop.permute.xlu0 %378
        %382 = vset.pattern.permute.xlu0 0
        %383 = vperm.xlu0 %382, %v329
        %v384 = vpop.permute.xlu0 %383
        %387 = vset.pattern.permute.xlu0 0
        %388 = vperm.xlu0 %387, %v330
        %v389 = vpop.permute.xlu0 %388
        %392 = vset.pattern.permute.xlu0 0
        %393 = vperm.xlu0 %392, %v331
        %v394 = vpop.permute.xlu0 %393
        %397 = vset.pattern.permute.xlu0 0
        %398 = vperm.xlu0 %397, %v332
        %v399 = vpop.permute.xlu0 %398
        %402 = vset.pattern.permute.xlu0 0
        %403 = vperm.xlu0 %402, %v333
        %v404 = vpop.permute.xlu0 %403
        %407 = vset.pattern.permute.xlu0 0
        %408 = vperm.xlu0 %407, %v334
        %v409 = vpop.permute.xlu0 %408
        %412 = vset.pattern.permute.xlu0 0
        %413 = vperm.xlu0 %412, %v335
        %v414 = vpop.permute.xlu0 %413
        %v432 = vunpack.c.l.b16 %v304
        %v433 = vunpack.c.l.b16 %v305
        %v434 = vunpack.c.l.b16 %v306
        %v435 = vunpack.c.l.b16 %v307
        %v436 = vunpack.c.l.b16 %v308
        %v437 = vunpack.c.l.b16 %v309
        %v438 = vunpack.c.l.b16 %v310
        %v439 = vunpack.c.l.b16 %v311
        %v440 = vunpack.c.l.b16 %v312
        %v441 = vunpack.c.l.b16 %v313
        %v442 = vunpack.c.l.b16 %v314
        %v443 = vunpack.c.l.b16 %v315
        %v444 = vunpack.c.l.b16 %v316
        %v445 = vunpack.c.l.b16 %v317
        %v446 = vunpack.c.l.b16 %v318
        %v447 = vunpack.c.l.b16 %v319
        %v448 = vpack.c.b16 %v433, %v432
        %v449 = vpack.c.b16 %v435, %v434
        %v450 = vpack.c.b16 %v437, %v436
        %v451 = vpack.c.b16 %v439, %v438
        %v452 = vpack.c.b16 %v441, %v440
        %v453 = vpack.c.b16 %v443, %v442
        %v454 = vpack.c.b16 %v445, %v444
        %v455 = vpack.c.b16 %v447, %v446
        %vm456 = vcmask 523264
        %v458 = vsel %vm456, %v448, 0
        %v461 = vsel %vm456, %v449, 0
        %v464 = vsel %vm456, %v450, 0
        %v467 = vsel %vm456, %v451, 0
        %v470 = vsel %vm456, %v452, 0
        %v473 = vsel %vm456, %v453, 0
        %v476 = vsel %vm456, %v454, 0
        %v479 = vsel %vm456, %v455, 0
        %v482 = vsel %vm456, %v296, 0
        %v485 = vsel %vm456, %v297, 0
        %v488 = vsel %vm456, %v298, 0
        %v491 = vsel %vm456, %v299, 0
        %v494 = vsel %vm456, %v300, 0
        %v497 = vsel %vm456, %v301, 0
        %v500 = vsel %vm456, %v302, 0
        %v503 = vsel %vm456, %v303, 0
        %505 = vmatprep.subr.bf16.mxu0 0
        %506 = vmatpush1.bf16.xpose.msra.mxu0 %v503
        %507 = vmatprep.subr.bf16.mxu0 0
        %508 = vmatpush1.bf16.xpose.msra.mxu0 %v500
        %509 = vmatprep.subr.bf16.mxu0 0
        %510 = vmatpush1.bf16.xpose.msra.mxu0 %v497
        %511 = vmatprep.subr.bf16.mxu0 0
        %512 = vmatpush1.bf16.xpose.msra.mxu0 %v494
        %513 = vmatprep.subr.bf16.mxu0 0
        %514 = vmatpush1.bf16.xpose.msra.mxu0 %v491
        %515 = vmatprep.subr.bf16.mxu0 0
        %516 = vmatpush1.bf16.xpose.msra.mxu0 %v488
        %517 = vmatprep.subr.bf16.mxu0 0
        %518 = vmatpush1.bf16.xpose.msra.mxu0 %v485
        %519 = vmatprep.subr.bf16.mxu0 0
        %520 = vmatpush1.bf16.xpose.msra.mxu0 %v482
        %521 = vmatprep.subr.bf16.mxu0 0
        %522 = vmatpush2.bf16.xpose.msra.mxu0 0
        %523 = vmatprep.subr.bf16.mxu0 0
        %524 = vmatpush2.bf16.xpose.msra.mxu0 0
        %525 = vmatprep.subr.bf16.mxu0 0
        %526 = vmatpush2.bf16.xpose.msra.mxu0 0
        %527 = vmatprep.subr.bf16.mxu0 0
        %528 = vmatpush2.bf16.xpose.msra.mxu0 0
        %529 = vmatprep.subr.bf16.mxu0 0
        %530 = vmatpush2.bf16.xpose.msra.mxu0 0
        %531 = vmatprep.subr.bf16.mxu0 0
        %532 = vmatpush2.bf16.xpose.msra.mxu0 0
        %533 = vmatprep.subr.bf16.mxu0 0
        %534 = vmatpush2.bf16.xpose.msra.mxu0 0
        %535 = vmatprep.subr.bf16.mxu0 0
        %536 = vmatpush2.bf16.xpose.msra.mxu0 0
        %537 = vmatprep.mubr.bf16.mxu0 0
        %538 = vmatmul.mubr.bf16.gmra.mxu0 %v458
        %v539 = vpop.f32.mrf.mxu0
        %v540 = vadd.f32 %v339, %v539
        %v541 = vpop.f32.mrf.mxu0
        %v542 = vpop.f32.mrf.mxu0
        %v543 = vadd.f32 %v344, %v542
        %v544 = vpop.f32.mrf.mxu0
        %545 = vmatprep.mubr.bf16.mxu0 0
        %546 = vmatmul.mubr.bf16.gmra.mxu0 %v461
        %v547 = vpop.f32.mrf.mxu0
        %v548 = vadd.f32 %v349, %v547
        %v549 = vpop.f32.mrf.mxu0
        %v550 = vpop.f32.mrf.mxu0
        %v551 = vadd.f32 %v354, %v550
        %v552 = vpop.f32.mrf.mxu0
        %553 = vmatprep.mubr.bf16.mxu0 0
        %554 = vmatmul.mubr.bf16.gmra.mxu0 %v464
        %v555 = vpop.f32.mrf.mxu0
        %v556 = vadd.f32 %v359, %v555
        %v557 = vpop.f32.mrf.mxu0
        %v558 = vpop.f32.mrf.mxu0
        %v559 = vadd.f32 %v364, %v558
        %v560 = vpop.f32.mrf.mxu0
        %561 = vmatprep.mubr.bf16.mxu0 0
        %562 = vmatmul.mubr.bf16.gmra.mxu0 %v467
        %v563 = vpop.f32.mrf.mxu0
        %v564 = vadd.f32 %v369, %v563
        %v565 = vpop.f32.mrf.mxu0
        %v566 = vpop.f32.mrf.mxu0
        %v567 = vadd.f32 %v374, %v566
        %v568 = vpop.f32.mrf.mxu0
        %569 = vmatprep.mubr.bf16.mxu0 0
        %570 = vmatmul.mubr.bf16.gmra.mxu0 %v470
        %v571 = vpop.f32.mrf.mxu0
        %v572 = vadd.f32 %v379, %v571
        %v573 = vpop.f32.mrf.mxu0
        %v574 = vpop.f32.mrf.mxu0
        %v575 = vadd.f32 %v384, %v574
        %v576 = vpop.f32.mrf.mxu0
        %577 = vmatprep.mubr.bf16.mxu0 0
        %578 = vmatmul.mubr.bf16.gmra.mxu0 %v473
        %v579 = vpop.f32.mrf.mxu0
        %v580 = vadd.f32 %v389, %v579
        %v581 = vpop.f32.mrf.mxu0
        %v582 = vpop.f32.mrf.mxu0
        %v583 = vadd.f32 %v394, %v582
        %v584 = vpop.f32.mrf.mxu0
        %585 = vmatprep.mubr.bf16.mxu0 0
        %586 = vmatmul.mubr.bf16.gmra.mxu0 %v476
        %v587 = vpop.f32.mrf.mxu0
        %v588 = vadd.f32 %v399, %v587
        %v589 = vpop.f32.mrf.mxu0
        %v590 = vpop.f32.mrf.mxu0
        %v591 = vadd.f32 %v404, %v590
        %v592 = vpop.f32.mrf.mxu0
        %593 = vmatprep.mubr.bf16.mxu0 0
        %594 = vmatmul.mubr.bf16.gmra.mxu0 %v479
        %v595 = vpop.f32.mrf.mxu0
        %v596 = vadd.f32 %v409, %v595
        %v597 = vpop.f32.mrf.mxu0
        %v598 = vpop.f32.mrf.mxu0
        %v599 = vadd.f32 %v414, %v598
        %v600 = vpop.f32.mrf.mxu0
        %601 = vdwg.mxu0
        %v602 = vmax.f32 %v540, 0.0
        %v603 = vmax.f32 %v543, 0.0
        %v604 = vmax.f32 %v548, 0.0
        %v605 = vmax.f32 %v551, 0.0
        %v606 = vmax.f32 %v556, 0.0
        %v607 = vmax.f32 %v559, 0.0
        %v608 = vmax.f32 %v564, 0.0
        %v609 = vmax.f32 %v567, 0.0
        %v610 = vmax.f32 %v572, 0.0
        %v611 = vmax.f32 %v575, 0.0
        %v612 = vmax.f32 %v580, 0.0
        %v613 = vmax.f32 %v583, 0.0
        %v614 = vmax.f32 %v588, 0.0
        %v615 = vmax.f32 %v591, 0.0
        %v616 = vmax.f32 %v596, 0.0
        %v617 = vmax.f32 %v599, 0.0
        %v618 = vpack.c.bf16 %v603, %v602
        %v619 = vpack.c.bf16 %v605, %v604
        %v620 = vpack.c.bf16 %v607, %v606
        %v621 = vpack.c.bf16 %v609, %v608
        %v622 = vpack.c.bf16 %v611, %v610
        %v623 = vpack.c.bf16 %v613, %v612
        %v624 = vpack.c.bf16 %v615, %v614
        %v625 = vpack.c.bf16 %v617, %v616
        %v626 = vld [vmem:[%s3] sm:$0xf]
        %v627 = vld [vmem:[%s3 + $0x4] sm:$0xf]
        %v628 = vld [vmem:[%s3 + $0x8] sm:$0xf]
        %v629 = vld [vmem:[%s3 + $0xc] sm:$0xf]
        %v630 = vld [vmem:[%s4] sm:$0xff]
        %v631 = vld [vmem:[%s4 + $0x8] sm:$0xff]
        %v632 = vld [vmem:[%s4 + $0x10] sm:$0xff]
        %v633 = vld [vmem:[%s4 + $0x18] sm:$0xff]
        %635 = vset.pattern.permute.xlu0 0
        %636 = vperm.xlu0 %635, %v630
        %v637 = vpop.permute.xlu0 %636
        %640 = vset.pattern.permute.xlu0 0
        %641 = vperm.xlu0 %640, %v631
        %v642 = vpop.permute.xlu0 %641
        %645 = vset.pattern.permute.xlu0 0
        %646 = vperm.xlu0 %645, %v632
        %v647 = vpop.permute.xlu0 %646
        %650 = vset.pattern.permute.xlu0 0
        %651 = vperm.xlu0 %650, %v633
        %v652 = vpop.permute.xlu0 %651
        %v658 = vunpack.c.l.b16 %v626
        %v659 = vunpack.c.l.b16 %v627
        %v660 = vunpack.c.l.b16 %v628
        %v661 = vunpack.c.l.b16 %v629
        %v662 = vpack.c.b16 %v659, %v658
        %v663 = vpack.c.b16 %v661, %v660
        %666 = vmatprep.subr.bf16.mxu0 0
        %667 = vmatpush1.bf16.msra.mxu0 %v625
        %668 = vmatprep.subr.bf16.mxu0 0
        %669 = vmatpush1.bf16.msra.mxu0 %v624
        %670 = vmatprep.subr.bf16.mxu0 0
        %671 = vmatpush1.bf16.msra.mxu0 %v623
        %672 = vmatprep.subr.bf16.mxu0 0
        %673 = vmatpush1.bf16.msra.mxu0 %v622
        %674 = vmatprep.subr.bf16.mxu0 0
        %675 = vmatpush1.bf16.msra.mxu0 %v621
        %676 = vmatprep.subr.bf16.mxu0 0
        %677 = vmatpush1.bf16.msra.mxu0 %v620
        %678 = vmatprep.subr.bf16.mxu0 0
        %679 = vmatpush1.bf16.msra.mxu0 %v619
        %680 = vmatprep.subr.bf16.mxu0 0
        %681 = vmatpush1.bf16.msra.mxu0 %v618
        %682 = vmatprep.subr.bf16.mxu0 0
        %683 = vmatpush2.bf16.msra.mxu0 0
        %684 = vmatprep.subr.bf16.mxu0 0
        %685 = vmatpush2.bf16.msra.mxu0 0
        %686 = vmatprep.subr.bf16.mxu0 0
        %687 = vmatpush2.bf16.msra.mxu0 0
        %688 = vmatprep.subr.bf16.mxu0 0
        %689 = vmatpush2.bf16.msra.mxu0 0
        %690 = vmatprep.subr.bf16.mxu0 0
        %691 = vmatpush2.bf16.msra.mxu0 0
        %692 = vmatprep.subr.bf16.mxu0 0
        %693 = vmatpush2.bf16.msra.mxu0 0
        %694 = vmatprep.subr.bf16.mxu0 0
        %695 = vmatpush2.bf16.msra.mxu0 0
        %696 = vmatprep.subr.bf16.mxu0 0
        %697 = vmatpush2.bf16.msra.mxu0 0
        %698 = vmatprep.mubr.bf16.mxu0 0
        %699 = vmatmul.mubr.bf16.gmra.mxu0 %v662
        %v700 = vpop.f32.mrf.mxu0
        %v701 = vadd.f32 %v637, %v700
        %v702 = vpop.f32.mrf.mxu0
        %v703 = vpop.f32.mrf.mxu0
        %v704 = vadd.f32 %v642, %v703
        %v705 = vpop.f32.mrf.mxu0
        %706 = vmatprep.mubr.bf16.mxu0 0
        %707 = vmatmul.mubr.bf16.gmra.mxu0 %v663
        %v708 = vpop.f32.mrf.mxu0
        %v709 = vadd.f32 %v647, %v708
        %v710 = vpop.f32.mrf.mxu0
        %v711 = vpop.f32.mrf.mxu0
        %v712 = vadd.f32 %v652, %v711
        %v713 = vpop.f32.mrf.mxu0
        %714 = vdwg.mxu0
        %v715 = vmax.f32 %v701, 0.0
        %v716 = vmax.f32 %v704, 0.0
        %v717 = vmax.f32 %v709, 0.0
        %v718 = vmax.f32 %v712, 0.0
        %v719 = vld [vmem:[%s5] sm:$0xff]
        %v720 = vld [vmem:[%s5 + $0x8] sm:$0xff]
        %v721 = vld [vmem:[%s5 + $0x10] sm:$0xff]
        %v722 = vld [vmem:[%s5 + $0x18] sm:$0xff]
        %724 = vset.pattern.permute.xlu0 0
        %725 = vperm.xlu0 %724, %v719
        %v726 = vpop.permute.xlu0 %725
        %729 = vset.pattern.permute.xlu0 0
        %730 = vperm.xlu0 %729, %v720
        %v731 = vpop.permute.xlu0 %730
        %734 = vset.pattern.permute.xlu0 0
        %735 = vperm.xlu0 %734, %v721
        %v736 = vpop.permute.xlu0 %735
        %739 = vset.pattern.permute.xlu0 0
        %740 = vperm.xlu0 %739, %v722
        %v741 = vpop.permute.xlu0 %740
        %v743 = vmul.f32 %v715, %v726
        %v744 = vmul.f32 %v716, %v731
        %v745 = vmul.f32 %v717, %v736
        %v746 = vmul.f32 %v718, %v741
        %v747 = vadd.f32 %v743, %v744
        %v748 = vadd.f32 %v747, %v745
        %v749 = vadd.f32 %v748, %v746
        %v750 = vrot.slane %v749, 4
        %v751 = vadd.f32 %v749, %v750
        %v752 = vrot.slane %v751, 2
        %v753 = vadd.f32 %v751, %v752
        %v754 = vrot.slane %v753, 1
        %v755 = vadd.f32 %v753, %v754
        %s756 = sld [smem:[#allocation2]]
        %v757 = vstv %s756
        %v758 = vadd.f32 %v755, %v757
        %v759 = vxor.u32 %v758, 2147483648
        %v760 = vmul.f32 %v759, 1.442695
        %v761 = vpow.pop %v760
        %v762 = vadd.f32 %v761, 1.0
        %v763 = vrcp.pop %v762
        %v764 = vmul.f32 1.0, %v763
        %765 = vst [vmem:[%s272] sm:$0x1] %v764
        %s766 = sand.u32 %s182, 1
        %s767 = scalar_lea.sflag [#allocation4], %s766
        %s768 = sand.u32 %s182, 1
        %s769 = scalar_lea.vmem [#allocation3], %s768
        // Predicated region
        $region49: #{tpu_custom_call.1} parent=47 // pred_check
          %p770 = pneg %p192
        $region50: #{tpu_custom_call.1} parent=47 // pred_check_branch
          %772 = sbr.rel (%p770) target = $region52
        $region51: #{tpu_custom_call.1} parent=47 // pred_region
          %s774 = ssub.s32 16, 16
          %775 = vsyncadd %s767, %s774
          %s776 = smul.addr %s22, 16
          %s777 = scalar_lea.hbm %s7, %s776
          %s779 = sshll.u32 %s769, 4
          %s780 = int_to_ptr.vmem [resolvable:$true] %s779
          %782 = dma.vmem_to_hbm [thread:$0]  %s780, 16, %s777, %s767
        $region52: #{tpu_custom_call.1} parent=47 // pred_fallthru
          _
      $region48: #{tpu_custom_call.1} parent=5 // pred_fallthru
        _
      %p783 = scmp.le.s32.totalorder 2, %s17
      // Predicated region
      $region53: #{tpu_custom_call.1} parent=5 // pred_check
        %p784 = pneg %p783
      $region54: #{tpu_custom_call.1} parent=5 // pred_check_branch
        %786 = sbr.rel (%p784) target = $region56
      $region55: #{tpu_custom_call.1} parent=5 // pred_region
        %s787 = ssub.s32 %s17, 2
        // Predicated region
        $region57: #{tpu_custom_call.1} parent=55 // pred_check
          %p788 = pneg %p198
        $region58: #{tpu_custom_call.1} parent=55 // pred_check_branch
          %790 = sbr.rel (%p788) target = $region60
        $region59: #{tpu_custom_call.1} parent=55 // pred_region
          %s791 = sand.u32 %s183, 1
          %s792 = scalar_lea.sflag [#allocation4], %s791
          %s793 = sand.u32 %s183, 1
          %s794 = scalar_lea.vmem [#allocation3], %s793
          %795 = dma.done %s792, 16
        $region60: #{tpu_custom_call.1} parent=55 // pred_fallthru
          _
      $region56: #{tpu_custom_call.1} parent=5 // pred_fallthru
        _
    $region6: #{tpu_custom_call.1} parent=1 // loop_footer
      %s21 = sadd.s32 1, %s17
    $region7: #{tpu_custom_call.1} parent=1 // loop_footer_branch
      %16 = sbr.rel target = $region3
    $region8: #{tpu_custom_call.1} parent=1 // loop_exit
      _
    %796 = vsyncpa [#allocation4], 1
    %s797 = scalar_lea.sflag [#allocation4], 1
    %798 = vsyncpa %s797, 1

// kernel: tpu_custom_call.1
$region0: #{tpu_custom_call.1}
  #allocation0 [shape = 'u32[]', space=smem, size = 0x4, offset = 0x4, fixed_abs, tag = 'smem constant byte address 0x4 - core index']
  #allocation1 [shape = 'u32[144,128]{1,0:T(1,128)}', space=vmem, size = 0x12000, scoped, tag = 'internal scratch']
  #allocation2 [shape = 'f32[1]{0:T(128)S(6)}', space=smem, size = 0x200, scoped, tag = 'scoped memory for tpu_custom_call.1']
  %s0 = inlined_call_operand.vmem [shape: f32[256,64], index: 0, kind: input, shape index: {}]
  %s1 = inlined_call_operand.vmem [shape: bf16[128,64], index: 1, kind: input, shape index: {}]
  %s2 = inlined_call_operand.vmem [shape: f32[128,1], index: 2, kind: input, shape index: {}]
  %s3 = inlined_call_operand.vmem [shape: bf16[32,128], index: 3, kind: input, shape index: {}]
  %s4 = inlined_call_operand.vmem [shape: f32[32,1], index: 4, kind: input, shape index: {}]
  %s5 = inlined_call_operand.vmem [shape: f32[32,1], index: 5, kind: input, shape index: {}]
  %s6 = inlined_call_operand.<no memory space> [shape: f32[1], index: 6, kind: input, shape index: {}]
  %s7 = inlined_call_operand.hbm [shape: f32[2,1,128], index: 7, kind: output, shape index: {}]
  %s8 = sld [smem:[#allocation0]]
  $region61: #{tpu_custom_call.1} parent=0
    _
  %s10 = ssub.s32 1, %s8
  %s11 = scalar_select 0, %s10, %s8
  %12 = sst [smem:[#allocation2]] %s6
  $region1: #{tpu_custom_call.1} parent=0
    #allocation3 [shape = 'u8[1024]{0}', space=vmem, size = 0x400, scoped, tag = 'output window, operand 0']
    #allocation4 [shape = 's32[2]{0}', space=sflag, size = 0x8, scoped, tag = 'scoped memory for tpu_custom_call.1']
    %13 = vsyncpa [#allocation4], 0
    %s14 = scalar_lea.sflag [#allocation4], 1
    %15 = vsyncpa %s14, 0
    loop: start=0, step=1, limit=4
    $region2: #{tpu_custom_call.1} parent=1 // loop_pre_header
      _
    $region3: #{tpu_custom_call.1} parent=1 // loop_header
      %s17 = sphi 0, %s21
      %p18 = scmp.ge.s32.totalorder %s17, 4
      %s27 = sphi 0, %s29
      %s30 = sphi 0, %s27
      %s31 = sphi 0, %s30
      %s47 = sphi 0, %s31
      %s51 = sphi 0, %s51
      %s53 = sphi 0, %s51
      %s54 = sphi 0, %s53
      %s68 = sphi 0, %s54
      %s72 = sphi 0, %s72
      %s74 = sphi 0, %s72
      %s75 = sphi 0, %s74
      %s89 = sphi 0, %s75
      %s93 = sphi 0, %s93
      %s95 = sphi 0, %s93
      %s96 = sphi 0, %s95
      %s110 = sphi 0, %s96
      %s114 = sphi 0, %s114
      %s116 = sphi 0, %s114
      %s117 = sphi 0, %s116
      %s131 = sphi 0, %s117
      %s135 = sphi 0, %s135
      %s137 = sphi 0, %s135
      %s138 = sphi 0, %s137
      %s152 = sphi 0, %s138
      %s156 = sphi 0, %s156
      %s158 = sphi 0, %s156
      %s159 = sphi 0, %s158
      %s173 = sphi 0, %s159
      %s179 = sphi 0, %s181
      %s182 = sphi 0, %s179
      %s183 = sphi 0, %s182
      %s199 = sphi 0, %s183
    $region4: #{tpu_custom_call.1} parent=1 // loop_header_branch
      %20 = sbr.rel (%p18) target = $region8
    $region5: #{tpu_custom_call.1} parent=1 // loop_body
      %s22 = ssub.s32 %s17, 1
      %s23 = ssub.s32 %s17, 2
      %s24 = sadd.s32 %s17, 1
      %s25 = ssub.s32 %s17, %s24
      %p26 = scmp.eq.s32.totalorder %s25, 0
      %s28 = sadd.s32 %s27, 1
      %s29 = scalar_select %p26, %s27, %s28
      %p32 = pneg %p26
      %p33 = scmp.eq.s32.totalorder %s17, 1
      %p34 = por %p32, %p33
      %p35 = scmp.ne.s32.totalorder %s27, %s30
      %p36 = scmp.eq.s32.totalorder %s17, 0
      %p37 = por %p35, %p36
      %p38 = scmp.ne.s32.totalorder %s27, %s30
      %p39 = scmp.eq.s32.totalorder %s22, 1
      %p40 = por %p38, %p39
      %p41 = scmp.ne.s32.totalorder %s30, %s31
      %p42 = scmp.eq.s32.totalorder %s22, 0
      %p43 = por %p41, %p42
      %p44 = scmp.ne.s32.totalorder %s30, %s31
      %p45 = scmp.eq.s32.totalorder %s23, 1
      %p46 = por %p44, %p45
      %p48 = scmp.ne.s32.totalorder %s31, %s47
      %p49 = scmp.eq.s32.totalorder %s23, 0
      %p50 = por %p48, %p49
      %s52 = sadd.s32 %s51, 1
      %p55 = scmp.eq.s32.totalorder %s17, 1
      %p56 = scmp.ne.s32.totalorder %s51, %s53
      %p57 = scmp.eq.s32.totalorder %s17, 0
      %p58 = por %p56, %p57
      %p59 = scmp.ne.s32.totalorder %s51, %s53
      %p60 = scmp.eq.s32.totalorder %s22, 1
      %p61 = por %p59, %p60
      %p62 = scmp.ne.s32.totalorder %s53, %s54
      %p63 = scmp.eq.s32.totalorder %s22, 0
      %p64 = por %p62, %p63
      %p65 = scmp.ne.s32.totalorder %s53, %s54
      %p66 = scmp.eq.s32.totalorder %s23, 1
      %p67 = por %p65, %p66
      %p69 = scmp.ne.s32.totalorder %s54, %s68
      %p70 = scmp.eq.s32.totalorder %s23, 0
      %p71 = por %p69, %p70
      %s73 = sadd.s32 %s72, 1
      %p76 = scmp.eq.s32.totalorder %s17, 1
      %p77 = scmp.ne.s32.totalorder %s72, %s74
      %p78 = scmp.eq.s32.totalorder %s17, 0
      %p79 = por %p77, %p78
      %p80 = scmp.ne.s32.totalorder %s72, %s74
      %p81 = scmp.eq.s32.totalorder %s22, 1
      %p82 = por %p80, %p81
      %p83 = scmp.ne.s32.totalorder %s74, %s75
      %p84 = scmp.eq.s32.totalorder %s22, 0
      %p85 = por %p83, %p84
      %p86 = scmp.ne.s32.totalorder %s74, %s75
      %p87 = scmp.eq.s32.totalorder %s23, 1
      %p88 = por %p86, %p87
      %p90 = scmp.ne.s32.totalorder %s75, %s89
      %p91 = scmp.eq.s32.totalorder %s23, 0
      %p92 = por %p90, %p91
      %s94 = sadd.s32 %s93, 1
      %p97 = scmp.eq.s32.totalorder %s17, 1
      %p98 = scmp.ne.s32.totalorder %s93, %s95
      %p99 = scmp.eq.s32.totalorder %s17, 0
      %p100 = por %p98, %p99
      %p101 = scmp.ne.s32.totalorder %s93, %s95
      %p102 = scmp.eq.s32.totalorder %s22, 1
      %p103 = por %p101, %p102
      %p104 = scmp.ne.s32.totalorder %s95, %s96
      %p105 = scmp.eq.s32.totalorder %s22, 0
      %p106 = por %p104, %p105
      %p107 = scmp.ne.s32.totalorder %s95, %s96
      %p108 = scmp.eq.s32.totalorder %s23, 1
      %p109 = por %p107, %p108
      %p111 = scmp.ne.s32.totalorder %s96, %s110
      %p112 = scmp.eq.s32.totalorder %s23, 0
      %p113 = por %p111, %p112
      %s115 = sadd.s32 %s114, 1
      %p118 = scmp.eq.s32.totalorder %s17, 1
      %p119 = scmp.ne.s32.totalorder %s114, %s116
      %p120 = scmp.eq.s32.totalorder %s17, 0
      %p121 = por %p119, %p120
      %p122 = scmp.ne.s32.totalorder %s114, %s116
      %p123 = scmp.eq.s32.totalorder %s22, 1
      %p124 = por %p122, %p123
      %p125 = scmp.ne.s32.totalorder %s116, %s117
      %p126 = scmp.eq.s32.totalorder %s22, 0
      %p127 = por %p125, %p126
      %p128 = scmp.ne.s32.totalorder %s116, %s117
      %p129 = scmp.eq.s32.totalorder %s23, 1
      %p130 = por %p128, %p129
      %p132 = scmp.ne.s32.totalorder %s117, %s131
      %p133 = scmp.eq.s32.totalorder %s23, 0
      %p134 = por %p132, %p133
      %s136 = sadd.s32 %s135, 1
      %p139 = scmp.eq.s32.totalorder %s17, 1
      %p140 = scmp.ne.s32.totalorder %s135, %s137
      %p141 = scmp.eq.s32.totalorder %s17, 0
      %p142 = por %p140, %p141
      %p143 = scmp.ne.s32.totalorder %s135, %s137
      %p144 = scmp.eq.s32.totalorder %s22, 1
      %p145 = por %p143, %p144
      %p146 = scmp.ne.s32.totalorder %s137, %s138
      %p147 = scmp.eq.s32.totalorder %s22, 0
      %p148 = por %p146, %p147
      %p149 = scmp.ne.s32.totalorder %s137, %s138
      %p150 = scmp.eq.s32.totalorder %s23, 1
      %p151 = por %p149, %p150
      %p153 = scmp.ne.s32.totalorder %s138, %s152
      %p154 = scmp.eq.s32.totalorder %s23, 0
      %p155 = por %p153, %p154
      %s157 = sadd.s32 %s156, 1
      %p160 = scmp.eq.s32.totalorder %s17, 1
      %p161 = scmp.ne.s32.totalorder %s156, %s158
      %p162 = scmp.eq.s32.totalorder %s17, 0
      %p163 = por %p161, %p162
      %p164 = scmp.ne.s32.totalorder %s156, %s158
      %p165 = scmp.eq.s32.totalorder %s22, 1
      %p166 = por %p164, %p165
      %p167 = scmp.ne.s32.totalorder %s158, %s159
      %p168 = scmp.eq.s32.totalorder %s22, 0
      %p169 = por %p167, %p168
      %p170 = scmp.ne.s32.totalorder %s158, %s159
      %p171 = scmp.eq.s32.totalorder %s23, 1
      %p172 = por %p170, %p171
      %p174 = scmp.ne.s32.totalorder %s159, %s173
      %p175 = scmp.eq.s32.totalorder %s23, 0
      %p176 = por %p174, %p175
      %s177 = ssub.s32 %s17, %s24
      %p178 = scmp.eq.s32.totalorder %s177, 0
      %s180 = sadd.s32 %s179, 1
      %s181 = scalar_select %p178, %s179, %s180
      %p184 = pneg %p178
      %p185 = scmp.eq.s32.totalorder %s17, 1
      %p186 = por %p184, %p185
      %p187 = scmp.ne.s32.totalorder %s179, %s182
      %p188 = scmp.eq.s32.totalorder %s17, 0
      %p189 = por %p187, %p188
      %p190 = scmp.ne.s32.totalorder %s179, %s182
      %p191 = scmp.eq.s32.totalorder %s22, 1
      %p192 = por %p190, %p191
      %p193 = scmp.ne.s32.totalorder %s182, %s183
      %p194 = scmp.eq.s32.totalorder %s22, 0
      %p195 = por %p193, %p194
      %p196 = scmp.ne.s32.totalorder %s182, %s183
      %p197 = scmp.eq.s32.totalorder %s23, 1
      %p198 = por %p196, %p197
      %p200 = scmp.ne.s32.totalorder %s183, %s199
      %p201 = scmp.eq.s32.totalorder %s23, 0
      %p202 = por %p200, %p201
      %p203 = scmp.le.s32.totalorder 1, %s17
      %p204 = scmp.lt.s32.totalorder %s17, 3
      %p205 = pnand %p203, %p204
      %p206 = pneg %p205
      // Predicated region
      $region9: #{tpu_custom_call.1} parent=5 // pred_check
        _
      $region10: #{tpu_custom_call.1} parent=5 // pred_check_branch
        %208 = sbr.rel (%p205) target = $region12
      $region11: #{tpu_custom_call.1} parent=5 // pred_region
        %s209 = ssub.s32 %s17, 1
        // Predicated region
        $region13: #{tpu_custom_call.1} parent=11 // pred_check
          %p210 = pneg %p64
        $region14: #{tpu_custom_call.1} parent=11 // pred_check_branch
          %212 = sbr.rel (%p210) target = $region16
        $region15: #{tpu_custom_call.1} parent=11 // pred_region
          _
        $region16: #{tpu_custom_call.1} parent=11 // pred_fallthru
          _
        // Predicated region
        $region17: #{tpu_custom_call.1} parent=11 // pred_check
          %p213 = pneg %p85
        $region18: #{tpu_custom_call.1} parent=11 // pred_check_branch
          %215 = sbr.rel (%p213) target = $region20
        $region19: #{tpu_custom_call.1} parent=11 // pred_region
          _
        $region20: #{tpu_custom_call.1} parent=11 // pred_fallthru
          _
        // Predicated region
        $region21: #{tpu_custom_call.1} parent=11 // pred_check
          %p216 = pneg %p106
        $region22: #{tpu_custom_call.1} parent=11 // pred_check_branch
          %218 = sbr.rel (%p216) target = $region24
        $region23: #{tpu_custom_call.1} parent=11 // pred_region
          _
        $region24: #{tpu_custom_call.1} parent=11 // pred_fallthru
          _
        // Predicated region
        $region25: #{tpu_custom_call.1} parent=11 // pred_check
          %p219 = pneg %p127
        $region26: #{tpu_custom_call.1} parent=11 // pred_check_branch
          %221 = sbr.rel (%p219) target = $region28
        $region27: #{tpu_custom_call.1} parent=11 // pred_region
          _
        $region28: #{tpu_custom_call.1} parent=11 // pred_fallthru
          _
        // Predicated region
        $region29: #{tpu_custom_call.1} parent=11 // pred_check
          %p222 = pneg %p148
        $region30: #{tpu_custom_call.1} parent=11 // pred_check_branch
          %224 = sbr.rel (%p222) target = $region32
        $region31: #{tpu_custom_call.1} parent=11 // pred_region
          _
        $region32: #{tpu_custom_call.1} parent=11 // pred_fallthru
          _
        // Predicated region
        $region33: #{tpu_custom_call.1} parent=11 // pred_check
          %p225 = pneg %p169
        $region34: #{tpu_custom_call.1} parent=11 // pred_check_branch
          %227 = sbr.rel (%p225) target = $region36
        $region35: #{tpu_custom_call.1} parent=11 // pred_region
          _
        $region36: #{tpu_custom_call.1} parent=11 // pred_fallthru
          _
      $region12: #{tpu_custom_call.1} parent=5 // pred_fallthru
        _
      %p228 = scmp.lt.s32.totalorder %s17, 2
      // Predicated region
      $region37: #{tpu_custom_call.1} parent=5 // pred_check
        %p229 = pneg %p228
      $region38: #{tpu_custom_call.1} parent=5 // pred_check_branch
        %231 = sbr.rel (%p229) target = $region40
      $region39: #{tpu_custom_call.1} parent=5 // pred_region
        // Predicated region
        $region41: #{tpu_custom_call.1} parent=39 // pred_check
          %p232 = pneg %p37
        $region42: #{tpu_custom_call.1} parent=39 // pred_check_branch
          %234 = sbr.rel (%p232) target = $region44
        $region43: #{tpu_custom_call.1} parent=39 // pred_region
          %s235 = smul.u32 16, %s17
          %p236 = scmp.lt.s32.totalorder %s235, 31
          %s237 = scalar_select %p236, %s235, 31
          %s238 = smul.addr %s237, 8
          %s239 = scalar_lea.vmem %s0, %s238
          %s240 = smul.u32 16, %s17
        $region44: #{tpu_custom_call.1} parent=39 // pred_fallthru
          _
      $region40: #{tpu_custom_call.1} parent=5 // pred_fallthru
        _
      %p241 = scmp.le.s32.totalorder 1, %s17
      %p242 = scmp.lt.s32.totalorder %s17, 3
      %p243 = pnand %p241, %p242
      %p244 = pneg %p243
      // Predicated region
      $region45: #{tpu_custom_call.1} parent=5 // pred_check
        _
      $region46: #{tpu_custom_call.1} parent=5 // pred_check_branch
        %246 = sbr.rel (%p243) target = $region48
      $region47: #{tpu_custom_call.1} parent=5 // pred_region
        %s247 = ssub.s32 %s17, 1
        %s248 = smul.u32 16, %s22
        %p249 = scmp.lt.s32.totalorder %s248, 31
        %s250 = scalar_select %p249, %s248, 31
        %s251 = smul.addr %s250, 8
        %s252 = scalar_lea.vmem %s0, %s251
        %p253 = pneg %p43
        %p254 = pneg %p40
        %p255 = pneg %p64
        %p256 = pneg %p61
        %p257 = pneg %p85
        %p258 = pneg %p82
        %p259 = pneg %p106
        %p260 = pneg %p103
        %p261 = pneg %p127
        %p262 = pneg %p124
        %p263 = pneg %p148
        %p264 = pneg %p145
        %p265 = pneg %p169
        %p266 = pneg %p166
        %p267 = pneg %p195
        %p268 = pneg %p192
        %s269 = sand.u32 %s182, 1
        %s270 = scalar_lea.sflag [#allocation4], %s269
        %s271 = sand.u32 %s182, 1
        %s272 = scalar_lea.vmem [#allocation3], %s271
        %s273 = smul.u32 16, %s22
        %p274 = scmp.lt.s32.totalorder %s273, 31
        %s275 = scalar_select %p274, %s273, 31
        %s276 = smul.addr %s275, 8
        %s277 = scalar_lea.vmem %s0, %s276
        %s278 = smul.u32 16, %s22
        %v280 = vld [vmem:[%s277] sm:$0xff]
        %v281 = vld [vmem:[%s277 + $0x8] sm:$0xff]
        %v282 = vld [vmem:[%s277 + $0x10] sm:$0xff]
        %v283 = vld [vmem:[%s277 + $0x18] sm:$0xff]
        %v284 = vld [vmem:[%s277 + $0x20] sm:$0xff]
        %v285 = vld [vmem:[%s277 + $0x28] sm:$0xff]
        %v286 = vld [vmem:[%s277 + $0x30] sm:$0xff]
        %v287 = vld [vmem:[%s277 + $0x38] sm:$0xff]
        %v288 = vld [vmem:[%s277 + $0x40] sm:$0xff]
        %v289 = vld [vmem:[%s277 + $0x48] sm:$0xff]
        %v290 = vld [vmem:[%s277 + $0x50] sm:$0xff]
        %v291 = vld [vmem:[%s277 + $0x58] sm:$0xff]
        %v292 = vld [vmem:[%s277 + $0x60] sm:$0xff]
        %v293 = vld [vmem:[%s277 + $0x68] sm:$0xff]
        %v294 = vld [vmem:[%s277 + $0x70] sm:$0xff]
        %v295 = vld [vmem:[%s277 + $0x78] sm:$0xff]
        %v296 = vpack.c.bf16 %v281, %v280
        %v297 = vpack.c.bf16 %v283, %v282
        %v298 = vpack.c.bf16 %v285, %v284
        %v299 = vpack.c.bf16 %v287, %v286
        %v300 = vpack.c.bf16 %v289, %v288
        %v301 = vpack.c.bf16 %v291, %v290
        %v302 = vpack.c.bf16 %v293, %v292
        %v303 = vpack.c.bf16 %v295, %v294
        %v304 = vld [vmem:[%s1] sm:$0xf]
        %v305 = vld [vmem:[%s1 + $0x4] sm:$0xf]
        %v306 = vld [vmem:[%s1 + $0x8] sm:$0xf]
        %v307 = vld [vmem:[%s1 + $0xc] sm:$0xf]
        %v308 = vld [vmem:[%s1 + $0x10] sm:$0xf]
        %v309 = vld [vmem:[%s1 + $0x14] sm:$0xf]
        %v310 = vld [vmem:[%s1 + $0x18] sm:$0xf]
        %v311 = vld [vmem:[%s1 + $0x1c] sm:$0xf]
        %v312 = vld [vmem:[%s1 + $0x20] sm:$0xf]
        %v313 = vld [vmem:[%s1 + $0x24] sm:$0xf]
        %v314 = vld [vmem:[%s1 + $0x28] sm:$0xf]
        %v315 = vld [vmem:[%s1 + $0x2c] sm:$0xf]
        %v316 = vld [vmem:[%s1 + $0x30] sm:$0xf]
        %v317 = vld [vmem:[%s1 + $0x34] sm:$0xf]
        %v318 = vld [vmem:[%s1 + $0x38] sm:$0xf]
        %v319 = vld [vmem:[%s1 + $0x3c] sm:$0xf]
        %v320 = vld [vmem:[%s2] sm:$0xff]
        %v321 = vld [vmem:[%s2 + $0x8] sm:$0xff]
        %v322 = vld [vmem:[%s2 + $0x10] sm:$0xff]
        %v323 = vld [vmem:[%s2 + $0x18] sm:$0xff]
        %v324 = vld [vmem:[%s2 + $0x20] sm:$0xff]
        %v325 = vld [vmem:[%s2 + $0x28] sm:$0xff]
        %v326 = vld [vmem:[%s2 + $0x30] sm:$0xff]
        %v327 = vld [vmem:[%s2 + $0x38] sm:$0xff]
        %v328 = vld [vmem:[%s2 + $0x40] sm:$0xff]
        %v329 = vld [vmem:[%s2 + $0x48] sm:$0xff]
        %v330 = vld [vmem:[%s2 + $0x50] sm:$0xff]
        %v331 = vld [vmem:[%s2 + $0x58] sm:$0xff]
        %v332 = vld [vmem:[%s2 + $0x60] sm:$0xff]
        %v333 = vld [vmem:[%s2 + $0x68] sm:$0xff]
        %v334 = vld [vmem:[%s2 + $0x70] sm:$0xff]
        %v335 = vld [vmem:[%s2 + $0x78] sm:$0xff]
        %337 = vset.pattern.permute.xlu0 0
        %338 = vperm.xlu0 %337, %v320
        %v339 = vpop.permute.xlu0 %338
        %342 = vset.pattern.permute.xlu0 0
        %343 = vperm.xlu0 %342, %v321
        %v344 = vpop.permute.xlu0 %343
        %347 = vset.pattern.permute.xlu0 0
        %348 = vperm.xlu0 %347, %v322
        %v349 = vpop.permute.xlu0 %348
        %352 = vset.pattern.permute.xlu0 0
        %353 = vperm.xlu0 %352, %v323
        %v354 = vpop.permute.xlu0 %353
        %357 = vset.pattern.permute.xlu0 0
        %358 = vperm.xlu0 %357, %v324
        %v359 = vpop.permute.xlu0 %358
        %362 = vset.pattern.permute.xlu0 0
        %363 = vperm.xlu0 %362, %v325
        %v364 = vpop.permute.xlu0 %363
        %367 = vset.pattern.permute.xlu0 0
        %368 = vperm.xlu0 %367, %v326
        %v369 = vpop.permute.xlu0 %368
        %372 = vset.pattern.permute.xlu0 0
        %373 = vperm.xlu0 %372, %v327
        %v374 = vpop.permute.xlu0 %373
        %377 = vset.pattern.permute.xlu0 0
        %378 = vperm.xlu0 %377, %v328
        %v379 = vpop.permute.xlu0 %378
        %382 = vset.pattern.permute.xlu0 0
        %383 = vperm.xlu0 %382, %v329
        %v384 = vpop.permute.xlu0 %383
        %387 = vset.pattern.permute.xlu0 0
        %388 = vperm.xlu0 %387, %v330
        %v389 = vpop.permute.xlu0 %388
        %392 = vset.pattern.permute.xlu0 0
        %393 = vperm.xlu0 %392, %v331
        %v394 = vpop.permute.xlu0 %393
        %397 = vset.pattern.permute.xlu0 0
        %398 = vperm.xlu0 %397, %v332
        %v399 = vpop.permute.xlu0 %398
        %402 = vset.pattern.permute.xlu0 0
        %403 = vperm.xlu0 %402, %v333
        %v404 = vpop.permute.xlu0 %403
        %407 = vset.pattern.permute.xlu0 0
        %408 = vperm.xlu0 %407, %v334
        %v409 = vpop.permute.xlu0 %408
        %412 = vset.pattern.permute.xlu0 0
        %413 = vperm.xlu0 %412, %v335
        %v414 = vpop.permute.xlu0 %413
        %v432 = vunpack.c.l.b16 %v304
        %v433 = vunpack.c.l.b16 %v305
        %v434 = vunpack.c.l.b16 %v306
        %v435 = vunpack.c.l.b16 %v307
        %v436 = vunpack.c.l.b16 %v308
        %v437 = vunpack.c.l.b16 %v309
        %v438 = vunpack.c.l.b16 %v310
        %v439 = vunpack.c.l.b16 %v311
        %v440 = vunpack.c.l.b16 %v312
        %v441 = vunpack.c.l.b16 %v313
        %v442 = vunpack.c.l.b16 %v314
        %v443 = vunpack.c.l.b16 %v315
        %v444 = vunpack.c.l.b16 %v316
        %v445 = vunpack.c.l.b16 %v317
        %v446 = vunpack.c.l.b16 %v318
        %v447 = vunpack.c.l.b16 %v319
        %v448 = vpack.c.b16 %v433, %v432
        %v449 = vpack.c.b16 %v435, %v434
        %v450 = vpack.c.b16 %v437, %v436
        %v451 = vpack.c.b16 %v439, %v438
        %v452 = vpack.c.b16 %v441, %v440
        %v453 = vpack.c.b16 %v443, %v442
        %v454 = vpack.c.b16 %v445, %v444
        %v455 = vpack.c.b16 %v447, %v446
        %vm456 = vcmask 523264
        %v458 = vsel %vm456, %v448, 0
        %v461 = vsel %vm456, %v449, 0
        %v464 = vsel %vm456, %v450, 0
        %v467 = vsel %vm456, %v451, 0
        %v470 = vsel %vm456, %v452, 0
        %v473 = vsel %vm456, %v453, 0
        %v476 = vsel %vm456, %v454, 0
        %v479 = vsel %vm456, %v455, 0
        %v482 = vsel %vm456, %v296, 0
        %v485 = vsel %vm456, %v297, 0
        %v488 = vsel %vm456, %v298, 0
        %v491 = vsel %vm456, %v299, 0
        %v494 = vsel %vm456, %v300, 0
        %v497 = vsel %vm456, %v301, 0
        %v500 = vsel %vm456, %v302, 0
        %v503 = vsel %vm456, %v303, 0
        %505 = vmatprep.subr.bf16.mxu0 0
        %506 = vmatpush1.bf16.xpose.msra.mxu0 %v503
        %507 = vmatprep.subr.bf16.mxu0 0
        %508 = vmatpush1.bf16.xpose.msra.mxu0 %v500
        %509 = vmatprep.subr.bf16.mxu0 0
        %510 = vmatpush1.bf16.xpose.msra.mxu0 %v497
        %511 = vmatprep.subr.bf16.mxu0 0
        %512 = vmatpush1.bf16.xpose.msra.mxu0 %v494
        %513 = vmatprep.subr.bf16.mxu0 0
        %514 = vmatpush1.bf16.xpose.msra.mxu0 %v491
        %515 = vmatprep.subr.bf16.mxu0 0
        %516 = vmatpush1.bf16.xpose.msra.mxu0 %v488
        %517 = vmatprep.subr.bf16.mxu0 0
        %518 = vmatpush1.bf16.xpose.msra.mxu0 %v485
        %519 = vmatprep.subr.bf16.mxu0 0
        %520 = vmatpush1.bf16.xpose.msra.mxu0 %v482
        %521 = vmatprep.subr.bf16.mxu0 0
        %522 = vmatpush2.bf16.xpose.msra.mxu0 0
        %523 = vmatprep.subr.bf16.mxu0 0
        %524 = vmatpush2.bf16.xpose.msra.mxu0 0
        %525 = vmatprep.subr.bf16.mxu0 0
        %526 = vmatpush2.bf16.xpose.msra.mxu0 0
        %527 = vmatprep.subr.bf16.mxu0 0
        %528 = vmatpush2.bf16.xpose.msra.mxu0 0
        %529 = vmatprep.subr.bf16.mxu0 0
        %530 = vmatpush2.bf16.xpose.msra.mxu0 0
        %531 = vmatprep.subr.bf16.mxu0 0
        %532 = vmatpush2.bf16.xpose.msra.mxu0 0
        %533 = vmatprep.subr.bf16.mxu0 0
        %534 = vmatpush2.bf16.xpose.msra.mxu0 0
        %535 = vmatprep.subr.bf16.mxu0 0
        %536 = vmatpush2.bf16.xpose.msra.mxu0 0
        %537 = vmatprep.mubr.bf16.mxu0 0
        %538 = vmatmul.mubr.bf16.gmra.mxu0 %v458
        %v539 = vpop.f32.mrf.mxu0
        %v540 = vadd.f32 %v339, %v539
        %v541 = vpop.f32.mrf.mxu0
        %v542 = vpop.f32.mrf.mxu0
        %v543 = vadd.f32 %v344, %v542
        %v544 = vpop.f32.mrf.mxu0
        %545 = vmatprep.mubr.bf16.mxu0 0
        %546 = vmatmul.mubr.bf16.gmra.mxu0 %v461
        %v547 = vpop.f32.mrf.mxu0
        %v548 = vadd.f32 %v349, %v547
        %v549 = vpop.f32.mrf.mxu0
        %v550 = vpop.f32.mrf.mxu0
        %v551 = vadd.f32 %v354, %v550
        %v552 = vpop.f32.mrf.mxu0
        %553 = vmatprep.mubr.bf16.mxu0 0
        %554 = vmatmul.mubr.bf16.gmra.mxu0 %v464
        %v555 = vpop.f32.mrf.mxu0
        %v556 = vadd.f32 %v359, %v555
        %v557 = vpop.f32.mrf.mxu0
        %v558 = vpop.f32.mrf.mxu0
        %v559 = vadd.f32 %v364, %v558
        %v560 = vpop.f32.mrf.mxu0
        %561 = vmatprep.mubr.bf16.mxu0 0
        %562 = vmatmul.mubr.bf16.gmra.mxu0 %v467
        %v563 = vpop.f32.mrf.mxu0
        %v564 = vadd.f32 %v369, %v563
        %v565 = vpop.f32.mrf.mxu0
        %v566 = vpop.f32.mrf.mxu0
        %v567 = vadd.f32 %v374, %v566
        %v568 = vpop.f32.mrf.mxu0
        %569 = vmatprep.mubr.bf16.mxu0 0
        %570 = vmatmul.mubr.bf16.gmra.mxu0 %v470
        %v571 = vpop.f32.mrf.mxu0
        %v572 = vadd.f32 %v379, %v571
        %v573 = vpop.f32.mrf.mxu0
        %v574 = vpop.f32.mrf.mxu0
        %v575 = vadd.f32 %v384, %v574
        %v576 = vpop.f32.mrf.mxu0
        %577 = vmatprep.mubr.bf16.mxu0 0
        %578 = vmatmul.mubr.bf16.gmra.mxu0 %v473
        %v579 = vpop.f32.mrf.mxu0
        %v580 = vadd.f32 %v389, %v579
        %v581 = vpop.f32.mrf.mxu0
        %v582 = vpop.f32.mrf.mxu0
        %v583 = vadd.f32 %v394, %v582
        %v584 = vpop.f32.mrf.mxu0
        %585 = vmatprep.mubr.bf16.mxu0 0
        %586 = vmatmul.mubr.bf16.gmra.mxu0 %v476
        %v587 = vpop.f32.mrf.mxu0
        %v588 = vadd.f32 %v399, %v587
        %v589 = vpop.f32.mrf.mxu0
        %v590 = vpop.f32.mrf.mxu0
        %v591 = vadd.f32 %v404, %v590
        %v592 = vpop.f32.mrf.mxu0
        %593 = vmatprep.mubr.bf16.mxu0 0
        %594 = vmatmul.mubr.bf16.gmra.mxu0 %v479
        %v595 = vpop.f32.mrf.mxu0
        %v596 = vadd.f32 %v409, %v595
        %v597 = vpop.f32.mrf.mxu0
        %v598 = vpop.f32.mrf.mxu0
        %v599 = vadd.f32 %v414, %v598
        %v600 = vpop.f32.mrf.mxu0
        %601 = vdwg.mxu0
        %v602 = vmax.f32 %v540, 0.0
        %v603 = vmax.f32 %v543, 0.0
        %v604 = vmax.f32 %v548, 0.0
        %v605 = vmax.f32 %v551, 0.0
        %v606 = vmax.f32 %v556, 0.0
        %v607 = vmax.f32 %v559, 0.0
        %v608 = vmax.f32 %v564, 0.0
        %v609 = vmax.f32 %v567, 0.0
        %v610 = vmax.f32 %v572, 0.0
        %v611 = vmax.f32 %v575, 0.0
        %v612 = vmax.f32 %v580, 0.0
        %v613 = vmax.f32 %v583, 0.0
        %v614 = vmax.f32 %v588, 0.0
        %v615 = vmax.f32 %v591, 0.0
        %v616 = vmax.f32 %v596, 0.0
        %v617 = vmax.f32 %v599, 0.0
        %v618 = vpack.c.bf16 %v603, %v602
        %v619 = vpack.c.bf16 %v605, %v604
        %v620 = vpack.c.bf16 %v607, %v606
        %v621 = vpack.c.bf16 %v609, %v608
        %v622 = vpack.c.bf16 %v611, %v610
        %v623 = vpack.c.bf16 %v613, %v612
        %v624 = vpack.c.bf16 %v615, %v614
        %v625 = vpack.c.bf16 %v617, %v616
        %v626 = vld [vmem:[%s3] sm:$0xf]
        %v627 = vld [vmem:[%s3 + $0x4] sm:$0xf]
        %v628 = vld [vmem:[%s3 + $0x8] sm:$0xf]
        %v629 = vld [vmem:[%s3 + $0xc] sm:$0xf]
        %v630 = vld [vmem:[%s4] sm:$0xff]
        %v631 = vld [vmem:[%s4 + $0x8] sm:$0xff]
        %v632 = vld [vmem:[%s4 + $0x10] sm:$0xff]
        %v633 = vld [vmem:[%s4 + $0x18] sm:$0xff]
        %635 = vset.pattern.permute.xlu0 0
        %636 = vperm.xlu0 %635, %v630
        %v637 = vpop.permute.xlu0 %636
        %640 = vset.pattern.permute.xlu0 0
        %641 = vperm.xlu0 %640, %v631
        %v642 = vpop.permute.xlu0 %641
        %645 = vset.pattern.permute.xlu0 0
        %646 = vperm.xlu0 %645, %v632
        %v647 = vpop.permute.xlu0 %646
        %650 = vset.pattern.permute.xlu0 0
        %651 = vperm.xlu0 %650, %v633
        %v652 = vpop.permute.xlu0 %651
        %v658 = vunpack.c.l.b16 %v626
        %v659 = vunpack.c.l.b16 %v627
        %v660 = vunpack.c.l.b16 %v628
        %v661 = vunpack.c.l.b16 %v629
        %v662 = vpack.c.b16 %v659, %v658
        %v663 = vpack.c.b16 %v661, %v660
        %666 = vmatprep.subr.bf16.mxu0 0
        %667 = vmatpush1.bf16.msra.mxu0 %v625
        %668 = vmatprep.subr.bf16.mxu0 0
        %669 = vmatpush1.bf16.msra.mxu0 %v624
        %670 = vmatprep.subr.bf16.mxu0 0
        %671 = vmatpush1.bf16.msra.mxu0 %v623
        %672 = vmatprep.subr.bf16.mxu0 0
        %673 = vmatpush1.bf16.msra.mxu0 %v622
        %674 = vmatprep.subr.bf16.mxu0 0
        %675 = vmatpush1.bf16.msra.mxu0 %v621
        %676 = vmatprep.subr.bf16.mxu0 0
        %677 = vmatpush1.bf16.msra.mxu0 %v620
        %678 = vmatprep.subr.bf16.mxu0 0
        %679 = vmatpush1.bf16.msra.mxu0 %v619
        %680 = vmatprep.subr.bf16.mxu0 0
        %681 = vmatpush1.bf16.msra.mxu0 %v618
        %682 = vmatprep.subr.bf16.mxu0 0
        %683 = vmatpush2.bf16.msra.mxu0 0
        %684 = vmatprep.subr.bf16.mxu0 0
        %685 = vmatpush2.bf16.msra.mxu0 0
        %686 = vmatprep.subr.bf16.mxu0 0
        %687 = vmatpush2.bf16.msra.mxu0 0
        %688 = vmatprep.subr.bf16.mxu0 0
        %689 = vmatpush2.bf16.msra.mxu0 0
        %690 = vmatprep.subr.bf16.mxu0 0
        %691 = vmatpush2.bf16.msra.mxu0 0
        %692 = vmatprep.subr.bf16.mxu0 0
        %693 = vmatpush2.bf16.msra.mxu0 0
        %694 = vmatprep.subr.bf16.mxu0 0
        %695 = vmatpush2.bf16.msra.mxu0 0
        %696 = vmatprep.subr.bf16.mxu0 0
        %697 = vmatpush2.bf16.msra.mxu0 0
        %698 = vmatprep.mubr.bf16.mxu0 0
        %699 = vmatmul.mubr.bf16.gmra.mxu0 %v662
        %v700 = vpop.f32.mrf.mxu0
        %v701 = vadd.f32 %v637, %v700
        %v702 = vpop.f32.mrf.mxu0
        %v703 = vpop.f32.mrf.mxu0
        %v704 = vadd.f32 %v642, %v703
        %v705 = vpop.f32.mrf.mxu0
        %706 = vmatprep.mubr.bf16.mxu0 0
        %707 = vmatmul.mubr.bf16.gmra.mxu0 %v663
        %v708 = vpop.f32.mrf.mxu0
        %v709 = vadd.f32 %v647, %v708
        %v710 = vpop.f32.mrf.mxu0
        %v711 = vpop.f32.mrf.mxu0
        %v712 = vadd.f32 %v652, %v711
        %v713 = vpop.f32.mrf.mxu0
        %714 = vdwg.mxu0
        %v715 = vmax.f32 %v701, 0.0
        %v716 = vmax.f32 %v704, 0.0
        %v717 = vmax.f32 %v709, 0.0
        %v718 = vmax.f32 %v712, 0.0
        %v719 = vld [vmem:[%s5] sm:$0xff]
        %v720 = vld [vmem:[%s5 + $0x8] sm:$0xff]
        %v721 = vld [vmem:[%s5 + $0x10] sm:$0xff]
        %v722 = vld [vmem:[%s5 + $0x18] sm:$0xff]
        %724 = vset.pattern.permute.xlu0 0
        %725 = vperm.xlu0 %724, %v719
        %v726 = vpop.permute.xlu0 %725
        %729 = vset.pattern.permute.xlu0 0
        %730 = vperm.xlu0 %729, %v720
        %v731 = vpop.permute.xlu0 %730
        %734 = vset.pattern.permute.xlu0 0
        %735 = vperm.xlu0 %734, %v721
        %v736 = vpop.permute.xlu0 %735
        %739 = vset.pattern.permute.xlu0 0
        %740 = vperm.xlu0 %739, %v722
        %v741 = vpop.permute.xlu0 %740
        %v743 = vmul.f32 %v715, %v726
        %v744 = vmul.f32 %v716, %v731
        %v745 = vmul.f32 %v717, %v736
        %v746 = vmul.f32 %v718, %v741
        %v747 = vadd.f32 %v743, %v744
        %v748 = vadd.f32 %v747, %v745
        %v749 = vadd.f32 %v748, %v746
        %v750 = vrot.slane %v749, 4
        %v751 = vadd.f32 %v749, %v750
        %v752 = vrot.slane %v751, 2
        %v753 = vadd.f32 %v751, %v752
        %v754 = vrot.slane %v753, 1
        %v755 = vadd.f32 %v753, %v754
        %s756 = sld [smem:[#allocation2]]
        %v757 = vstv %s756
        %v758 = vadd.f32 %v755, %v757
        %v759 = vxor.u32 %v758, 2147483648
        %v760 = vmul.f32 %v759, 1.442695
        %v761 = vpow.pop %v760
        %v762 = vadd.f32 %v761, 1.0
        %v763 = vrcp.pop %v762
        %v764 = vmul.f32 1.0, %v763
        %765 = vst [vmem:[%s272] sm:$0x1] %v764
        %s766 = sand.u32 %s182, 1
        %s767 = scalar_lea.sflag [#allocation4], %s766
        %s768 = sand.u32 %s182, 1
        %s769 = scalar_lea.vmem [#allocation3], %s768
        // Predicated region
        $region49: #{tpu_custom_call.1} parent=47 // pred_check
          %p770 = pneg %p192
        $region50: #{tpu_custom_call.1} parent=47 // pred_check_branch
          %772 = sbr.rel (%p770) target = $region52
        $region51: #{tpu_custom_call.1} parent=47 // pred_region
          %s774 = ssub.s32 16, 16
          %775 = vsyncadd %s767, %s774
          %s776 = smul.addr %s22, 16
          %s777 = scalar_lea.hbm %s7, %s776
          %s779 = sshll.u32 %s769, 4
          %s780 = int_to_ptr.vmem [resolvable:$true] %s779
          %782 = dma.vmem_to_hbm [thread:$0]  %s780, 16, %s777, %s767
        $region52: #{tpu_custom_call.1} parent=47 // pred_fallthru
          _
      $region48: #{tpu_custom_call.1} parent=5 // pred_fallthru
        _
      %p783 = scmp.le.s32.totalorder 2, %s17
      // Predicated region
      $region53: #{tpu_custom_call.1} parent=5 // pred_check
        %p784 = pneg %p783
      $region54: #{tpu_custom_call.1} parent=5 // pred_check_branch
        %786 = sbr.rel (%p784) target = $region56
      $region55: #{tpu_custom_call.1} parent=5 // pred_region
        %s787 = ssub.s32 %s17, 2
        // Predicated region
        $region57: #{tpu_custom_call.1} parent=55 // pred_check
          %p788 = pneg %p198
        $region58: #{tpu_custom_call.1} parent=55 // pred_check_branch
          %790 = sbr.rel (%p788) target = $region60
        $region59: #{tpu_custom_call.1} parent=55 // pred_region
          %s791 = sand.u32 %s183, 1
          %s792 = scalar_lea.sflag [#allocation4], %s791
          %s793 = sand.u32 %s183, 1
          %s794 = scalar_lea.vmem [#allocation3], %s793
          %795 = dma.done %s792, 16
        $region60: #{tpu_custom_call.1} parent=55 // pred_fallthru
          _
      $region56: #{tpu_custom_call.1} parent=5 // pred_fallthru
        _
    $region6: #{tpu_custom_call.1} parent=1 // loop_footer
      %s21 = sadd.s32 1, %s17
    $region7: #{tpu_custom_call.1} parent=1 // loop_footer_branch
      %16 = sbr.rel target = $region3
    $region8: #{tpu_custom_call.1} parent=1 // loop_exit
      _
    %796 = vsyncpa [#allocation4], 1
    %s797 = scalar_lea.sflag [#allocation4], 1
    %798 = vsyncpa %s797, 1

</llo_original>
